<compile_context>
chip_gen: v6e
topology: v6e:2x2x1
jax: 0.10.0
libtpu: 0.0.40
codegen_flags: <defaults>
</compile_context>

<pallas_src>
import jax
import jax.numpy as jnp
from jax.experimental import pallas as pl
from jax.experimental.pallas import tpu as pltpu


HIDDEN = 64


def _mlp_kernel(x_ref, w1_ref, b1_ref, w2_ref, b2_ref, w3_ref, b3_ref, o_ref):
    x = x_ref[...]                                            # (TB, D) f32

    # Layer 1: relu(x @ W1^T + b1)                            -> (TB, H)
    h1 = jnp.dot(x, w1_ref[...], preferred_element_type=jnp.float32)
    h1 = jnp.maximum(h1 + b1_ref[...], 0.0)

    # Dropout(0.3): identity in inference (eval) mode.
    # TODO(synk): training-mode dropout (pltpu.prng_seed/prng_random_bits with
    # per-tile seed and 1/(1-p) scaling) is not implemented.

    # Layer 2: relu(h1 @ W2^T + b2)                           -> (TB, H)
    h2 = jnp.dot(h1, w2_ref[...], preferred_element_type=jnp.float32)
    h2 = jnp.maximum(h2 + b2_ref[...], 0.0)

    # Layer 3: (TB, H) @ (H, 1) on the (idle) MXU + SMEM scalar bias.
    z = jnp.dot(h2, w3_ref[...], preferred_element_type=jnp.float32) + b3_ref[0, 0]

    # Exact sigmoid: EUP exp + exact divide; output tile is only (TB, 1) so
    # the exact reciprocal is negligible and the result stays in [0, 1].
    o_ref[...] = (1.0 / (1.0 + jnp.exp(-z))).astype(o_ref.dtype)


def pose_classifier_forward(x, params, *, block_b=None):
    """x: (B, D) float32; params in PyTorch layout.  Returns (B, 1) float32."""
    w1, b1, w2, b2, w3, b3 = params
    B, D = x.shape
    H = w1.shape[0]

    if block_b is None:
        # Target ~512-wide batch tiles; halve for small batches so there are
        # >= 2 tiles and both v7x TensorCores get work on the "parallel" axis.
        block_b = 512
        while block_b > 128 and B <= block_b:
            block_b //= 2
    assert block_b % 8 == 0, "batch tile must be a sublane (8) multiple"

    num_tiles = pl.cdiv(B, block_b)

    # One-time weight layout prep (tiny): (out, in) -> (in, out) so the x
    # row-block is the matmul LHS in its native layout; biases -> (1, H) rows.
    w1t = w1.T                              # (D, H)
    w2t = w2.T                              # (H, H)
    b1r = b1.reshape(1, H)
    b2r = b2.reshape(1, H)
    w3c = w3.reshape(H, 1)
    b3s = b3.reshape(1, 1)

    resident = lambda shape: pl.BlockSpec(shape, lambda i: (0, 0))

    cost = pl.CostEstimate(
        flops=2 * B * (H * D + H * H + H),
        transcendentals=B,
        bytes_accessed=(B * D + B) * 4 + (D * H + H * H + 3 * H + 1) * 4,
    )

    return pl.pallas_call(
        _mlp_kernel,
        grid=(num_tiles,),
        in_specs=[
            pl.BlockSpec((block_b, D), lambda i: (i, 0)),       # x row-block (streams)
            resident((D, H)),                                   # W1^T (resident)
            resident((1, H)),                                   # b1
            resident((H, H)),                                   # W2^T
            resident((1, H)),                                   # b2
            resident((H, 1)),                                   # w3 column
            pl.BlockSpec(memory_space=pltpu.MemorySpace.SMEM),  # b3 scalar
        ],
        out_specs=pl.BlockSpec((block_b, 1), lambda i: (i, 0)),
        out_shape=jax.ShapeDtypeStruct((B, 1), jnp.float32),
        compiler_params=pltpu.CompilerParams(
            dimension_semantics=("parallel",)),   # v7x: split batch tiles over 2 TCs
        cost_estimate=cost,
    )(x, w1t, b1r, w2t, b2r, w3c, b3s)


def init_params(key, input_dim, hidden=HIDDEN):
    """PyTorch nn.Linear default init (uniform +-1/sqrt(fan_in)), PyTorch layout."""
    ks = jax.random.split(key, 6)

    def linear(kw, kb, fan_in, fan_out):
        bound = 1.0 / (fan_in ** 0.5)
        w = jax.random.uniform(kw, (fan_out, fan_in), jnp.float32, -bound, bound)
        b = jax.random.uniform(kb, (fan_out,), jnp.float32, -bound, bound)
        return w, b

    w1, b1 = linear(ks[0], ks[1], input_dim, hidden)
    w2, b2 = linear(ks[2], ks[3], hidden, hidden)
    w3, b3 = linear(ks[4], ks[5], hidden, 1)        # w3: (1, hidden), b3: (1,)
    return (w1, b1, w2, b2, w3, b3)


def reference_forward(x, w1, b1, w2, b2, w3, b3):
    """Plain-JAX f32 reference with PyTorch semantics (eval-mode dropout)."""
    h1 = jnp.maximum(x @ w1.T + b1, 0.0)
    h2 = jnp.maximum(h1 @ w2.T + b2, 0.0)
    return jax.nn.sigmoid(h2 @ w3.T + b3)


if __name__ == "__main__":
    key = jax.random.PRNGKey(0)
    k_x, k_p = jax.random.split(key)

    B, INPUT_DIM = 500, 32        # B deliberately NOT a multiple of the batch tile
    x = jax.random.normal(k_x, (B, INPUT_DIM), jnp.float32)
    params = init_params(k_p, INPUT_DIM)

    out = pose_classifier_forward(x, params)       # auto block_b=256 -> 2 tiles
    out = jax.block_until_ready(out)

    ref = reference_forward(x, *params)
    assert out.shape == (B, 1)
    assert bool(jnp.all((out >= 0.0) & (out <= 1.0)))
    # Tolerance covers possibly bf16-reduced default MXU matmul passes.
    assert jnp.allclose(out, ref, atol=1e-2), float(jnp.max(jnp.abs(out - ref)))

    print("KERNEL_OK")
</pallas_src>

<mosaic_0001>
module attributes {stable_mosaic.version = 11 : i64} {
  func.func @_mlp_kernel(%arg0: i32, %arg1: memref<256x32xf32, #tpu.memory_space<vmem>>, %arg2: memref<32x64xf32, #tpu.memory_space<vmem>>, %arg3: memref<1x64xf32, #tpu.memory_space<vmem>>, %arg4: memref<64x64xf32, #tpu.memory_space<vmem>>, %arg5: memref<1x64xf32, #tpu.memory_space<vmem>>, %arg6: memref<64x1xf32, #tpu.memory_space<vmem>>, %arg7: memref<1x1xf32, #tpu.memory_space<smem>>, %arg8: memref<256x1xf32, #tpu.memory_space<vmem>>) attributes {dimension_semantics = [#tpu.dimension_semantics<parallel>], iteration_bounds = array<i64: 2>, scalar_prefetch = 0 : i64, scratch_operands = 0 : i64, tpu.core_type = #tpu.core_type<tc>, window_params = [{transform_indices = @transform_0, window_bounds = array<i64: 256, 32>}, {pipeline_mode = #tpu.pipeline_mode<synchronous>, transform_indices = @transform_1, window_bounds = array<i64: 32, 64>}, {pipeline_mode = #tpu.pipeline_mode<synchronous>, transform_indices = @transform_2, window_bounds = array<i64: 1, 64>}, {pipeline_mode = #tpu.pipeline_mode<synchronous>, transform_indices = @transform_3, window_bounds = array<i64: 64, 64>}, {pipeline_mode = #tpu.pipeline_mode<synchronous>, transform_indices = @transform_4, window_bounds = array<i64: 1, 64>}, {pipeline_mode = #tpu.pipeline_mode<synchronous>, transform_indices = @transform_5, window_bounds = array<i64: 64, 1>}, {transform_indices = @transform_6, window_bounds = array<i64: 1, 1>}, {transform_indices = @transform_7, window_bounds = array<i64: 256, 1>}]} {
    %c0 = arith.constant 0 : index
    %c0_0 = arith.constant 0 : index
    %0 = vector.load %arg1[%c0, %c0_0] : memref<256x32xf32, #tpu.memory_space<vmem>>, vector<256x32xf32>
    %c0_1 = arith.constant 0 : index
    %c0_2 = arith.constant 0 : index
    %1 = vector.load %arg2[%c0_1, %c0_2] : memref<32x64xf32, #tpu.memory_space<vmem>>, vector<32x64xf32>
    %cst = arith.constant dense<0.000000e+00> : vector<256x64xf32>
    %2 = tpu.matmul %0, %1, %cst {dimension_numbers = #tpu.dot_dimension_numbers<[1], [0], [0], [1], [0, 0, 1, 1], [], []>} : vector<256x32xf32>, vector<32x64xf32>, vector<256x64xf32> -> vector<256x64xf32>
    %c0_3 = arith.constant 0 : index
    %c0_4 = arith.constant 0 : index
    %3 = vector.load %arg3[%c0_3, %c0_4] : memref<1x64xf32, #tpu.memory_space<vmem>>, vector<1x64xf32>
    %4 = vector.broadcast %3 : vector<1x64xf32> to vector<256x64xf32>
    %5 = arith.addf %2, %4 : vector<256x64xf32>
    %cst_5 = arith.constant 0.000000e+00 : f32
    %6 = vector.broadcast %cst_5 : f32 to vector<256x64xf32>
    %7 = arith.maximumf %5, %6 : vector<256x64xf32>
    %c0_6 = arith.constant 0 : index
    %c0_7 = arith.constant 0 : index
    %8 = vector.load %arg4[%c0_6, %c0_7] : memref<64x64xf32, #tpu.memory_space<vmem>>, vector<64x64xf32>
    %cst_8 = arith.constant dense<0.000000e+00> : vector<256x64xf32>
    %9 = tpu.matmul %7, %8, %cst_8 {dimension_numbers = #tpu.dot_dimension_numbers<[1], [0], [0], [1], [0, 0, 1, 1], [], []>} : vector<256x64xf32>, vector<64x64xf32>, vector<256x64xf32> -> vector<256x64xf32>
    %c0_9 = arith.constant 0 : index
    %c0_10 = arith.constant 0 : index
    %10 = vector.load %arg5[%c0_9, %c0_10] : memref<1x64xf32, #tpu.memory_space<vmem>>, vector<1x64xf32>
    %11 = vector.broadcast %10 : vector<1x64xf32> to vector<256x64xf32>
    %12 = arith.addf %9, %11 : vector<256x64xf32>
    %cst_11 = arith.constant 0.000000e+00 : f32
    %13 = vector.broadcast %cst_11 : f32 to vector<256x64xf32>
    %14 = arith.maximumf %12, %13 : vector<256x64xf32>
    %c0_12 = arith.constant 0 : index
    %c0_13 = arith.constant 0 : index
    %15 = vector.load %arg6[%c0_12, %c0_13] : memref<64x1xf32, #tpu.memory_space<vmem>>, vector<64x1xf32>
    %cst_14 = arith.constant dense<0.000000e+00> : vector<256x1xf32>
    %16 = tpu.matmul %14, %15, %cst_14 {dimension_numbers = #tpu.dot_dimension_numbers<[1], [0], [0], [1], [0, 0, 1, 1], [], []>} : vector<256x64xf32>, vector<64x1xf32>, vector<256x1xf32> -> vector<256x1xf32>
    %c0_15 = arith.constant 0 : index
    %c0_16 = arith.constant 0 : index
    %17 = memref.load %arg7[%c0_15, %c0_16] : memref<1x1xf32, #tpu.memory_space<smem>>
    %18 = vector.broadcast %17 : f32 to vector<256x1xf32>
    %19 = arith.addf %16, %18 : vector<256x1xf32>
    %cst_17 = arith.constant 0.000000e+00 : f32
    %20 = vector.broadcast %cst_17 : f32 to vector<256x1xf32>
    %21 = arith.subf %20, %19 : vector<256x1xf32>
    %22 = math.exp %21 : vector<256x1xf32>
    %cst_18 = arith.constant 1.000000e+00 : f32
    %23 = vector.broadcast %cst_18 : f32 to vector<256x1xf32>
    %24 = arith.addf %23, %22 : vector<256x1xf32>
    %cst_19 = arith.constant 1.000000e+00 : f32
    %25 = vector.broadcast %cst_19 : f32 to vector<256x1xf32>
    %26 = arith.divf %25, %24 : vector<256x1xf32>
    %c0_20 = arith.constant 0 : index
    %c0_21 = arith.constant 0 : index
    %27 = vector.load %arg8[%c0_20, %c0_21] : memref<256x1xf32, #tpu.memory_space<vmem>>, vector<256x1xf32>
    tpu.vector_store %arg8[%c0_20, %c0_21], %26 {strides = array<i32>} : memref<256x1xf32, #tpu.memory_space<vmem>>, vector<256x1xf32>,
    return
  }
  func.func @transform_0(%arg0: i32) -> (i32, i32) {
    %c0_i32 = arith.constant 0 : i32
    %c0_i32_0 = arith.constant 0 : i32
    return %arg0, %c0_i32 : i32, i32
  }
  func.func @transform_1(%arg0: i32) -> (i32, i32) {
    %c0_i32 = arith.constant 0 : i32
    %c0_i32_0 = arith.constant 0 : i32
    %c0_i32_1 = arith.constant 0 : i32
    return %c0_i32, %c0_i32_0 : i32, i32
  }
  func.func @transform_2(%arg0: i32) -> (i32, i32) {
    %c0_i32 = arith.constant 0 : i32
    %c0_i32_0 = arith.constant 0 : i32
    %c0_i32_1 = arith.constant 0 : i32
    return %c0_i32, %c0_i32_0 : i32, i32
  }
  func.func @transform_3(%arg0: i32) -> (i32, i32) {
    %c0_i32 = arith.constant 0 : i32
    %c0_i32_0 = arith.constant 0 : i32
    %c0_i32_1 = arith.constant 0 : i32
    return %c0_i32, %c0_i32_0 : i32, i32
  }
  func.func @transform_4(%arg0: i32) -> (i32, i32) {
    %c0_i32 = arith.constant 0 : i32
    %c0_i32_0 = arith.constant 0 : i32
    %c0_i32_1 = arith.constant 0 : i32
    return %c0_i32, %c0_i32_0 : i32, i32
  }
  func.func @transform_5(%arg0: i32) -> (i32, i32) {
    %c0_i32 = arith.constant 0 : i32
    %c0_i32_0 = arith.constant 0 : i32
    %c0_i32_1 = arith.constant 0 : i32
    return %c0_i32, %c0_i32_0 : i32, i32
  }
  func.func @transform_6(%arg0: i32) -> (i32, i32) {
    %c0_i32 = arith.constant 0 : i32
    %c0_i32_0 = arith.constant 0 : i32
    %c0_i32_1 = arith.constant 0 : i32
    return %c0_i32, %c0_i32_0 : i32, i32
  }
  func.func @transform_7(%arg0: i32) -> (i32, i32) {
    %c0_i32 = arith.constant 0 : i32
    %c0_i32_0 = arith.constant 0 : i32
    return %arg0, %c0_i32 : i32, i32
  }
}

</mosaic_0001>

<llo_original>
// kernel: tpu_custom_call.1
$region0: #{tpu_custom_call.1}
  #allocation0 [shape = 'u32[]', space=smem, size = 0x4, offset = 0x4, fixed_abs, tag = 'smem constant byte address 0x4 - core index']
  #allocation1 [shape = 'u32[144,128]{1,0:T(1,128)}', space=vmem, size = 0x12000, scoped, tag = 'internal scratch']
  #allocation2 [shape = 'f32[1,1]{1,0:T(1,128)S(6)}', space=smem, size = 0x200, scoped, tag = 'scoped memory for tpu_custom_call.1']
  %s0 = inlined_call_operand.vmem [shape: f32[500,32], index: 0, kind: input, shape index: {}]
  %s1 = inlined_call_operand.vmem [shape: f32[32,64], index: 1, kind: input, shape index: {}]
  %s2 = inlined_call_operand.vmem [shape: f32[1,64], index: 2, kind: input, shape index: {}]
  %s3 = inlined_call_operand.vmem [shape: f32[64,64], index: 3, kind: input, shape index: {}]
  %s4 = inlined_call_operand.vmem [shape: f32[1,64], index: 4, kind: input, shape index: {}]
  %s5 = inlined_call_operand.vmem [shape: f32[64,1], index: 5, kind: input, shape index: {}]
  %s6 = inlined_call_operand.<no memory space> [shape: f32[1,1], index: 6, kind: input, shape index: {}]
  %s7 = inlined_call_operand.vmem [shape: f32[500,1], index: 7, kind: output, shape index: {}]
  %s8 = sld [smem:[#allocation0]]
  $region109: #{tpu_custom_call.1} parent=0
    _
  %s10 = ssub.s32 1, %s8
  %s11 = scalar_select 0, %s10, %s8
  %12 = sst [smem:[#allocation2]] %s6
  $region1: #{tpu_custom_call.1} parent=0
    #allocation3 [shape = 'u8[262144]{0}', space=vmem, size = 0x40000, scoped, tag = 'output window, operand 0']
    loop: start=0, step=1, limit=4
    $region2: #{tpu_custom_call.1} parent=1 // loop_pre_header
      _
    $region3: #{tpu_custom_call.1} parent=1 // loop_header
      %s14 = sphi 0, %s18
      %p15 = scmp.ge.s32.totalorder %s14, 4
      %s24 = sphi 0, %s26
      %s27 = sphi 0, %s24
      %s28 = sphi 0, %s27
      %s44 = sphi 0, %s28
      %s48 = sphi 0, %s48
      %s50 = sphi 0, %s48
      %s51 = sphi 0, %s50
      %s65 = sphi 0, %s51
      %s69 = sphi 0, %s69
      %s71 = sphi 0, %s69
      %s72 = sphi 0, %s71
      %s86 = sphi 0, %s72
      %s90 = sphi 0, %s90
      %s92 = sphi 0, %s90
      %s93 = sphi 0, %s92
      %s107 = sphi 0, %s93
      %s111 = sphi 0, %s111
      %s113 = sphi 0, %s111
      %s114 = sphi 0, %s113
      %s128 = sphi 0, %s114
      %s132 = sphi 0, %s132
      %s134 = sphi 0, %s132
      %s135 = sphi 0, %s134
      %s149 = sphi 0, %s135
      %s153 = sphi 0, %s153
      %s155 = sphi 0, %s153
      %s156 = sphi 0, %s155
      %s170 = sphi 0, %s156
      %s176 = sphi 0, %s178
      %s179 = sphi 0, %s176
      %s180 = sphi 0, %s179
      %s196 = sphi 0, %s180
    $region4: #{tpu_custom_call.1} parent=1 // loop_header_branch
      %17 = sbr.rel (%p15) target = $region8
    $region5: #{tpu_custom_call.1} parent=1 // loop_body
      %s19 = ssub.s32 %s14, 1
      %s20 = ssub.s32 %s14, 2
      %s21 = sadd.s32 %s14, 1
      %s22 = ssub.s32 %s14, %s21
      %p23 = scmp.eq.s32.totalorder %s22, 0
      %s25 = sadd.s32 %s24, 1
      %s26 = scalar_select %p23, %s24, %s25
      %p29 = pneg %p23
      %p30 = scmp.eq.s32.totalorder %s14, 1
      %p31 = por %p29, %p30
      %p32 = scmp.ne.s32.totalorder %s24, %s27
      %p33 = scmp.eq.s32.totalorder %s14, 0
      %p34 = por %p32, %p33
      %p35 = scmp.ne.s32.totalorder %s24, %s27
      %p36 = scmp.eq.s32.totalorder %s19, 1
      %p37 = por %p35, %p36
      %p38 = scmp.ne.s32.totalorder %s27, %s28
      %p39 = scmp.eq.s32.totalorder %s19, 0
      %p40 = por %p38, %p39
      %p41 = scmp.ne.s32.totalorder %s27, %s28
      %p42 = scmp.eq.s32.totalorder %s20, 1
      %p43 = por %p41, %p42
      %p45 = scmp.ne.s32.totalorder %s28, %s44
      %p46 = scmp.eq.s32.totalorder %s20, 0
      %p47 = por %p45, %p46
      %s49 = sadd.s32 %s48, 1
      %p52 = scmp.eq.s32.totalorder %s14, 1
      %p53 = scmp.ne.s32.totalorder %s48, %s50
      %p54 = scmp.eq.s32.totalorder %s14, 0
      %p55 = por %p53, %p54
      %p56 = scmp.ne.s32.totalorder %s48, %s50
      %p57 = scmp.eq.s32.totalorder %s19, 1
      %p58 = por %p56, %p57
      %p59 = scmp.ne.s32.totalorder %s50, %s51
      %p60 = scmp.eq.s32.totalorder %s19, 0
      %p61 = por %p59, %p60
      %p62 = scmp.ne.s32.totalorder %s50, %s51
      %p63 = scmp.eq.s32.totalorder %s20, 1
      %p64 = por %p62, %p63
      %p66 = scmp.ne.s32.totalorder %s51, %s65
      %p67 = scmp.eq.s32.totalorder %s20, 0
      %p68 = por %p66, %p67
      %s70 = sadd.s32 %s69, 1
      %p73 = scmp.eq.s32.totalorder %s14, 1
      %p74 = scmp.ne.s32.totalorder %s69, %s71
      %p75 = scmp.eq.s32.totalorder %s14, 0
      %p76 = por %p74, %p75
      %p77 = scmp.ne.s32.totalorder %s69, %s71
      %p78 = scmp.eq.s32.totalorder %s19, 1
      %p79 = por %p77, %p78
      %p80 = scmp.ne.s32.totalorder %s71, %s72
      %p81 = scmp.eq.s32.totalorder %s19, 0
      %p82 = por %p80, %p81
      %p83 = scmp.ne.s32.totalorder %s71, %s72
      %p84 = scmp.eq.s32.totalorder %s20, 1
      %p85 = por %p83, %p84
      %p87 = scmp.ne.s32.totalorder %s72, %s86
      %p88 = scmp.eq.s32.totalorder %s20, 0
      %p89 = por %p87, %p88
      %s91 = sadd.s32 %s90, 1
      %p94 = scmp.eq.s32.totalorder %s14, 1
      %p95 = scmp.ne.s32.totalorder %s90, %s92
      %p96 = scmp.eq.s32.totalorder %s14, 0
      %p97 = por %p95, %p96
      %p98 = scmp.ne.s32.totalorder %s90, %s92
      %p99 = scmp.eq.s32.totalorder %s19, 1
      %p100 = por %p98, %p99
      %p101 = scmp.ne.s32.totalorder %s92, %s93
      %p102 = scmp.eq.s32.totalorder %s19, 0
      %p103 = por %p101, %p102
      %p104 = scmp.ne.s32.totalorder %s92, %s93
      %p105 = scmp.eq.s32.totalorder %s20, 1
      %p106 = por %p104, %p105
      %p108 = scmp.ne.s32.totalorder %s93, %s107
      %p109 = scmp.eq.s32.totalorder %s20, 0
      %p110 = por %p108, %p109
      %s112 = sadd.s32 %s111, 1
      %p115 = scmp.eq.s32.totalorder %s14, 1
      %p116 = scmp.ne.s32.totalorder %s111, %s113
      %p117 = scmp.eq.s32.totalorder %s14, 0
      %p118 = por %p116, %p117
      %p119 = scmp.ne.s32.totalorder %s111, %s113
      %p120 = scmp.eq.s32.totalorder %s19, 1
      %p121 = por %p119, %p120
      %p122 = scmp.ne.s32.totalorder %s113, %s114
      %p123 = scmp.eq.s32.totalorder %s19, 0
      %p124 = por %p122, %p123
      %p125 = scmp.ne.s32.totalorder %s113, %s114
      %p126 = scmp.eq.s32.totalorder %s20, 1
      %p127 = por %p125, %p126
      %p129 = scmp.ne.s32.totalorder %s114, %s128
      %p130 = scmp.eq.s32.totalorder %s20, 0
      %p131 = por %p129, %p130
      %s133 = sadd.s32 %s132, 1
      %p136 = scmp.eq.s32.totalorder %s14, 1
      %p137 = scmp.ne.s32.totalorder %s132, %s134
      %p138 = scmp.eq.s32.totalorder %s14, 0
      %p139 = por %p137, %p138
      %p140 = scmp.ne.s32.totalorder %s132, %s134
      %p141 = scmp.eq.s32.totalorder %s19, 1
      %p142 = por %p140, %p141
      %p143 = scmp.ne.s32.totalorder %s134, %s135
      %p144 = scmp.eq.s32.totalorder %s19, 0
      %p145 = por %p143, %p144
      %p146 = scmp.ne.s32.totalorder %s134, %s135
      %p147 = scmp.eq.s32.totalorder %s20, 1
      %p148 = por %p146, %p147
      %p150 = scmp.ne.s32.totalorder %s135, %s149
      %p151 = scmp.eq.s32.totalorder %s20, 0
      %p152 = por %p150, %p151
      %s154 = sadd.s32 %s153, 1
      %p157 = scmp.eq.s32.totalorder %s14, 1
      %p158 = scmp.ne.s32.totalorder %s153, %s155
      %p159 = scmp.eq.s32.totalorder %s14, 0
      %p160 = por %p158, %p159
      %p161 = scmp.ne.s32.totalorder %s153, %s155
      %p162 = scmp.eq.s32.totalorder %s19, 1
      %p163 = por %p161, %p162
      %p164 = scmp.ne.s32.totalorder %s155, %s156
      %p165 = scmp.eq.s32.totalorder %s19, 0
      %p166 = por %p164, %p165
      %p167 = scmp.ne.s32.totalorder %s155, %s156
      %p168 = scmp.eq.s32.totalorder %s20, 1
      %p169 = por %p167, %p168
      %p171 = scmp.ne.s32.totalorder %s156, %s170
      %p172 = scmp.eq.s32.totalorder %s20, 0
      %p173 = por %p171, %p172
      %s174 = ssub.s32 %s14, %s21
      %p175 = scmp.eq.s32.totalorder %s174, 0
      %s177 = sadd.s32 %s176, 1
      %s178 = scalar_select %p175, %s176, %s177
      %p181 = pneg %p175
      %p182 = scmp.eq.s32.totalorder %s14, 1
      %p183 = por %p181, %p182
      %p184 = scmp.ne.s32.totalorder %s176, %s179
      %p185 = scmp.eq.s32.totalorder %s14, 0
      %p186 = por %p184, %p185
      %p187 = scmp.ne.s32.totalorder %s176, %s179
      %p188 = scmp.eq.s32.totalorder %s19, 1
      %p189 = por %p187, %p188
      %p190 = scmp.ne.s32.totalorder %s179, %s180
      %p191 = scmp.eq.s32.totalorder %s19, 0
      %p192 = por %p190, %p191
      %p193 = scmp.ne.s32.totalorder %s179, %s180
      %p194 = scmp.eq.s32.totalorder %s20, 1
      %p195 = por %p193, %p194
      %p197 = scmp.ne.s32.totalorder %s180, %s196
      %p198 = scmp.eq.s32.totalorder %s20, 0
      %p199 = por %p197, %p198
      %p200 = scmp.le.s32.totalorder 1, %s14
      %p201 = scmp.lt.s32.totalorder %s14, 3
      %p202 = pnand %p200, %p201
      %p203 = pneg %p202
      // Predicated region
      $region9: #{tpu_custom_call.1} parent=5 // pred_check
        _
      $region10: #{tpu_custom_call.1} parent=5 // pred_check_branch
        %205 = sbr.rel (%p202) target = $region12
      $region11: #{tpu_custom_call.1} parent=5 // pred_region
        %s206 = ssub.s32 %s14, 1
        // Predicated region
        $region13: #{tpu_custom_call.1} parent=11 // pred_check
          %p207 = pneg %p61
        $region14: #{tpu_custom_call.1} parent=11 // pred_check_branch
          %209 = sbr.rel (%p207) target = $region16
        $region15: #{tpu_custom_call.1} parent=11 // pred_region
          _
        $region16: #{tpu_custom_call.1} parent=11 // pred_fallthru
          _
        // Predicated region
        $region17: #{tpu_custom_call.1} parent=11 // pred_check
          %p210 = pneg %p82
        $region18: #{tpu_custom_call.1} parent=11 // pred_check_branch
          %212 = sbr.rel (%p210) target = $region20
        $region19: #{tpu_custom_call.1} parent=11 // pred_region
          _
        $region20: #{tpu_custom_call.1} parent=11 // pred_fallthru
          _
        // Predicated region
        $region21: #{tpu_custom_call.1} parent=11 // pred_check
          %p213 = pneg %p103
        $region22: #{tpu_custom_call.1} parent=11 // pred_check_branch
          %215 = sbr.rel (%p213) target = $region24
        $region23: #{tpu_custom_call.1} parent=11 // pred_region
          _
        $region24: #{tpu_custom_call.1} parent=11 // pred_fallthru
          _
        // Predicated region
        $region25: #{tpu_custom_call.1} parent=11 // pred_check
          %p216 = pneg %p124
        $region26: #{tpu_custom_call.1} parent=11 // pred_check_branch
          %218 = sbr.rel (%p216) target = $region28
        $region27: #{tpu_custom_call.1} parent=11 // pred_region
          _
        $region28: #{tpu_custom_call.1} parent=11 // pred_fallthru
          _
        // Predicated region
        $region29: #{tpu_custom_call.1} parent=11 // pred_check
          %p219 = pneg %p145
        $region30: #{tpu_custom_call.1} parent=11 // pred_check_branch
          %221 = sbr.rel (%p219) target = $region32
        $region31: #{tpu_custom_call.1} parent=11 // pred_region
          _
        $region32: #{tpu_custom_call.1} parent=11 // pred_fallthru
          _
        // Predicated region
        $region33: #{tpu_custom_call.1} parent=11 // pred_check
          %p222 = pneg %p166
        $region34: #{tpu_custom_call.1} parent=11 // pred_check_branch
          %224 = sbr.rel (%p222) target = $region36
        $region35: #{tpu_custom_call.1} parent=11 // pred_region
          _
        $region36: #{tpu_custom_call.1} parent=11 // pred_fallthru
          _
      $region12: #{tpu_custom_call.1} parent=5 // pred_fallthru
        _
      %p225 = scmp.lt.s32.totalorder %s14, 2
      // Predicated region
      $region37: #{tpu_custom_call.1} parent=5 // pred_check
        %p226 = pneg %p225
      $region38: #{tpu_custom_call.1} parent=5 // pred_check_branch
        %228 = sbr.rel (%p226) target = $region40
      $region39: #{tpu_custom_call.1} parent=5 // pred_region
        // Predicated region
        $region41: #{tpu_custom_call.1} parent=39 // pred_check
          %p229 = pneg %p34
        $region42: #{tpu_custom_call.1} parent=39 // pred_check_branch
          %231 = sbr.rel (%p229) target = $region44
        $region43: #{tpu_custom_call.1} parent=39 // pred_region
          %s232 = smul.u32 32, %s14
          %s233 = ssub.s32 63, %s232
          %p234 = scmp.lt.s32.totalorder %s233, 32
          %s235 = scalar_select %p234, %s233, 32
          %s236 = smul.u32 128, %s235
          %p237 = scmp.lt.s32.totalorder %s232, 62
          %s238 = scalar_select %p237, %s232, 62
          %s239 = smul.addr %s238, 8
          %s240 = scalar_lea.vmem %s0, %s239
          %s241 = smul.u32 32, %s14
          %s242 = ssub.s32 63, %s241
          %p243 = scmp.lt.s32.totalorder %s242, 32
          %s244 = scalar_select %p243, %s242, 32
          %s245 = smul.u32 128, %s244
        $region44: #{tpu_custom_call.1} parent=39 // pred_fallthru
          _
      $region40: #{tpu_custom_call.1} parent=5 // pred_fallthru
        _
      %p246 = scmp.le.s32.totalorder 1, %s14
      %p247 = scmp.lt.s32.totalorder %s14, 3
      %p248 = pnand %p246, %p247
      %p249 = pneg %p248
      // Predicated region
      $region45: #{tpu_custom_call.1} parent=5 // pred_check
        _
      $region46: #{tpu_custom_call.1} parent=5 // pred_check_branch
        %251 = sbr.rel (%p248) target = $region48
      $region47: #{tpu_custom_call.1} parent=5 // pred_region
        %s252 = ssub.s32 %s14, 1
        %s253 = smul.u32 32, %s19
        %s254 = ssub.s32 63, %s253
        %p255 = scmp.lt.s32.totalorder %s254, 32
        %s256 = scalar_select %p255, %s254, 32
        %s257 = smul.u32 128, %s256
        %p258 = scmp.lt.s32.totalorder %s253, 62
        %s259 = scalar_select %p258, %s253, 62
        %s260 = smul.addr %s259, 8
        %s261 = scalar_lea.vmem %s0, %s260
        %p262 = pneg %p40
        %p263 = pneg %p37
        %p264 = pneg %p61
        %p265 = pneg %p58
        %p266 = pneg %p82
        %p267 = pneg %p79
        %p268 = pneg %p103
        %p269 = pneg %p100
        %p270 = pneg %p124
        %p271 = pneg %p121
        %p272 = pneg %p145
        %p273 = pneg %p142
        %p274 = pneg %p166
        %p275 = pneg %p163
        %p276 = pneg %p192
        %p277 = pneg %p189
        %s278 = sand.u32 %s179, 1
        %s279 = sand.u32 %s179, 1
        %s280 = smul.addr %s279, 256
        %s281 = scalar_lea.vmem [#allocation3], %s280
        %s282 = smul.u32 32, %s19
        %s283 = ssub.s32 63, %s282
        %p284 = scmp.lt.s32.totalorder %s283, 32
        %s285 = scalar_select %p284, %s283, 32
        %s286 = smul.u32 128, %s285
        %p287 = scmp.lt.s32.totalorder %s282, 62
        %s288 = scalar_select %p287, %s282, 62
        %s289 = smul.addr %s288, 8
        %s290 = scalar_lea.vmem %s0, %s289
        %s291 = smul.u32 32, %s19
        %s292 = ssub.s32 63, %s291
        %p293 = scmp.lt.s32.totalorder %s292, 32
        %s294 = scalar_select %p293, %s292, 32
        %s295 = smul.u32 128, %s294
        %s296 = smul.u32 32, %s19
        %s297 = ssub.s32 63, %s296
        %p298 = scmp.lt.s32.totalorder %s297, 32
        %s299 = scalar_select %p298, %s297, 32
        %s300 = smul.u32 128, %s299
        %v301 = vld [vmem:[%s290] sm:$0xff]
        %v302 = vld [vmem:[%s290 + $0x8] sm:$0xff]
        %v303 = vld [vmem:[%s290 + $0x10] sm:$0xff]
        %v304 = vld [vmem:[%s290 + $0x18] sm:$0xff]
        %v305 = vld [vmem:[%s290 + $0x20] sm:$0xff]
        %v306 = vld [vmem:[%s290 + $0x28] sm:$0xff]
        %v307 = vld [vmem:[%s290 + $0x30] sm:$0xff]
        %v308 = vld [vmem:[%s290 + $0x38] sm:$0xff]
        %v309 = vld [vmem:[%s290 + $0x40] sm:$0xff]
        %v310 = vld [vmem:[%s290 + $0x48] sm:$0xff]
        %v311 = vld [vmem:[%s290 + $0x50] sm:$0xff]
        %v312 = vld [vmem:[%s290 + $0x58] sm:$0xff]
        %v313 = vld [vmem:[%s290 + $0x60] sm:$0xff]
        %v314 = vld [vmem:[%s290 + $0x68] sm:$0xff]
        %v315 = vld [vmem:[%s290 + $0x70] sm:$0xff]
        %v316 = vld [vmem:[%s290 + $0x78] sm:$0xff]
        %v317 = vld [vmem:[%s290 + $0x80] sm:$0xff]
        %v318 = vld [vmem:[%s290 + $0x88] sm:$0xff]
        %v319 = vld [vmem:[%s290 + $0x90] sm:$0xff]
        %v320 = vld [vmem:[%s290 + $0x98] sm:$0xff]
        %v321 = vld [vmem:[%s290 + $0xa0] sm:$0xff]
        %v322 = vld [vmem:[%s290 + $0xa8] sm:$0xff]
        %v323 = vld [vmem:[%s290 + $0xb0] sm:$0xff]
        %v324 = vld [vmem:[%s290 + $0xb8] sm:$0xff]
        %v325 = vld [vmem:[%s290 + $0xc0] sm:$0xff]
        %v326 = vld [vmem:[%s290 + $0xc8] sm:$0xff]
        %v327 = vld [vmem:[%s290 + $0xd0] sm:$0xff]
        %v328 = vld [vmem:[%s290 + $0xd8] sm:$0xff]
        %v329 = vld [vmem:[%s290 + $0xe0] sm:$0xff]
        %v330 = vld [vmem:[%s290 + $0xe8] sm:$0xff]
        %v331 = vld [vmem:[%s290 + $0xf0] sm:$0xff]
        %v332 = vld [vmem:[%s290 + $0xf8] sm:$0xff]
        %v333 = vld [vmem:[%s1] sm:$0xff]
        %v334 = vld [vmem:[%s1 + $0x8] sm:$0xff]
        %v335 = vld [vmem:[%s1 + $0x10] sm:$0xff]
        %v336 = vld [vmem:[%s1 + $0x18] sm:$0xff]
        %v337 = vld [vmem:[%s2] sm:$0x1]
        %v339 = vlaneseq
        %v340 = vshrl.u32 %v339, 7
        %v341 = vsub.s32 0, %v340
        %v342 = vrot.slane %v337, %v341
        %vm344 = vcmask 261120
        %v346 = vsel %vm344, %v301, 0
        %v349 = vsel %vm344, %v302, 0
        %v352 = vsel %vm344, %v303, 0
        %v355 = vsel %vm344, %v304, 0
        %v358 = vsel %vm344, %v305, 0
        %v361 = vsel %vm344, %v306, 0
        %v364 = vsel %vm344, %v307, 0
        %v367 = vsel %vm344, %v308, 0
        %v370 = vsel %vm344, %v309, 0
        %v373 = vsel %vm344, %v310, 0
        %v376 = vsel %vm344, %v311, 0
        %v379 = vsel %vm344, %v312, 0
        %v382 = vsel %vm344, %v313, 0
        %v385 = vsel %vm344, %v314, 0
        %v388 = vsel %vm344, %v315, 0
        %v391 = vsel %vm344, %v316, 0
        %v394 = vsel %vm344, %v317, 0
        %v397 = vsel %vm344, %v318, 0
        %v400 = vsel %vm344, %v319, 0
        %v403 = vsel %vm344, %v320, 0
        %v406 = vsel %vm344, %v321, 0
        %v409 = vsel %vm344, %v322, 0
        %v412 = vsel %vm344, %v323, 0
        %v415 = vsel %vm344, %v324, 0
        %v418 = vsel %vm344, %v325, 0
        %v421 = vsel %vm344, %v326, 0
        %v424 = vsel %vm344, %v327, 0
        %v427 = vsel %vm344, %v328, 0
        %v430 = vsel %vm344, %v329, 0
        %v433 = vsel %vm344, %v330, 0
        %v436 = vsel %vm344, %v331, 0
        %v439 = vsel %vm344, %v332, 0
        %441 = vmatprep.subr.mxu0 0.0
        %442 = vmatpush1.msra.mxu0 0.0
        %443 = vmatprep.subr.mxu0 0.0
        %444 = vmatpush1.msra.mxu0 0.0
        %445 = vmatprep.subr.mxu0 0.0
        %446 = vmatpush1.msra.mxu0 0.0
        %447 = vmatprep.subr.mxu0 0.0
        %448 = vmatpush1.msra.mxu0 0.0
        %449 = vmatprep.subr.mxu0 0.0
        %450 = vmatpush1.msra.mxu0 0.0
        %451 = vmatprep.subr.mxu0 0.0
        %452 = vmatpush1.msra.mxu0 0.0
        %453 = vmatprep.subr.mxu0 0.0
        %454 = vmatpush1.msra.mxu0 0.0
        %455 = vmatprep.subr.mxu0 0.0
        %456 = vmatpush1.msra.mxu0 0.0
        %457 = vmatprep.subr.mxu0 0.0
        %458 = vmatpush1.msra.mxu0 0.0
        %459 = vmatprep.subr.mxu0 0.0
        %460 = vmatpush1.msra.mxu0 0.0
        %461 = vmatprep.subr.mxu0 0.0
        %462 = vmatpush1.msra.mxu0 0.0
        %463 = vmatprep.subr.mxu0 0.0
        %464 = vmatpush1.msra.mxu0 0.0
        %465 = vmatprep.subr.mxu0 0.0
        %466 = vmatpush1.msra.mxu0 %v336
        %467 = vmatprep.subr.mxu0 0.0
        %468 = vmatpush1.msra.mxu0 %v335
        %469 = vmatprep.subr.mxu0 0.0
        %470 = vmatpush1.msra.mxu0 %v334
        %471 = vmatprep.subr.mxu0 0.0
        %472 = vmatpush1.msra.mxu0 %v333
        %473 = vmatprep.subr.mxu0 0.0
        %474 = vmatpush2.msra.mxu0 0.0
        %475 = vmatprep.subr.mxu0 0.0
        %476 = vmatpush2.msra.mxu0 0.0
        %477 = vmatprep.subr.mxu0 0.0
        %478 = vmatpush2.msra.mxu0 0.0
        %479 = vmatprep.subr.mxu0 0.0
        %480 = vmatpush2.msra.mxu0 0.0
        %481 = vmatprep.subr.mxu0 0.0
        %482 = vmatpush2.msra.mxu0 0.0
        %483 = vmatprep.subr.mxu0 0.0
        %484 = vmatpush2.msra.mxu0 0.0
        %485 = vmatprep.subr.mxu0 0.0
        %486 = vmatpush2.msra.mxu0 0.0
        %487 = vmatprep.subr.mxu0 0.0
        %488 = vmatpush2.msra.mxu0 0.0
        %489 = vmatprep.subr.mxu0 0.0
        %490 = vmatpush2.msra.mxu0 0.0
        %491 = vmatprep.subr.mxu0 0.0
        %492 = vmatpush2.msra.mxu0 0.0
        %493 = vmatprep.subr.mxu0 0.0
        %494 = vmatpush2.msra.mxu0 0.0
        %495 = vmatprep.subr.mxu0 0.0
        %496 = vmatpush2.msra.mxu0 0.0
        %497 = vmatprep.subr.mxu0 0.0
        %498 = vmatpush2.msra.mxu0 0.0
        %499 = vmatprep.subr.mxu0 0.0
        %500 = vmatpush2.msra.mxu0 0.0
        %501 = vmatprep.subr.mxu0 0.0
        %502 = vmatpush2.msra.mxu0 0.0
        %503 = vmatprep.subr.mxu0 0.0
        %504 = vmatpush2.msra.mxu0 0.0
        %505 = vmatprep.mubr.f32.mxu0 0.0
        %506 = vmatmul.mubr.f32.gmra.mxu0 %v346
        %v507 = vpop.f32.mrf.mxu0
        %v508 = vadd.f32 %v342, %v507
        %v509 = vpop.f32.mrf.mxu0
        %510 = vmatprep.mubr.f32.mxu0 0.0
        %511 = vmatmul.mubr.f32.gmra.mxu0 %v349
        %v512 = vpop.f32.mrf.mxu0
        %v513 = vadd.f32 %v342, %v512
        %v514 = vpop.f32.mrf.mxu0
        %515 = vmatprep.mubr.f32.mxu0 0.0
        %516 = vmatmul.mubr.f32.gmra.mxu0 %v352
        %v517 = vpop.f32.mrf.mxu0
        %v518 = vadd.f32 %v342, %v517
        %v519 = vpop.f32.mrf.mxu0
        %520 = vmatprep.mubr.f32.mxu0 0.0
        %521 = vmatmul.mubr.f32.gmra.mxu0 %v355
        %v522 = vpop.f32.mrf.mxu0
        %v523 = vadd.f32 %v342, %v522
        %v524 = vpop.f32.mrf.mxu0
        %525 = vmatprep.mubr.f32.mxu0 0.0
        %526 = vmatmul.mubr.f32.gmra.mxu0 %v358
        %v527 = vpop.f32.mrf.mxu0
        %v528 = vadd.f32 %v342, %v527
        %v529 = vpop.f32.mrf.mxu0
        %530 = vmatprep.mubr.f32.mxu0 0.0
        %531 = vmatmul.mubr.f32.gmra.mxu0 %v361
        %v532 = vpop.f32.mrf.mxu0
        %v533 = vadd.f32 %v342, %v532
        %v534 = vpop.f32.mrf.mxu0
        %535 = vmatprep.mubr.f32.mxu0 0.0
        %536 = vmatmul.mubr.f32.gmra.mxu0 %v364
        %v537 = vpop.f32.mrf.mxu0
        %v538 = vadd.f32 %v342, %v537
        %v539 = vpop.f32.mrf.mxu0
        %540 = vmatprep.mubr.f32.mxu0 0.0
        %541 = vmatmul.mubr.f32.gmra.mxu0 %v367
        %v542 = vpop.f32.mrf.mxu0
        %v543 = vadd.f32 %v342, %v542
        %v544 = vpop.f32.mrf.mxu0
        %545 = vmatprep.mubr.f32.mxu0 0.0
        %546 = vmatmul.mubr.f32.gmra.mxu0 %v370
        %v547 = vpop.f32.mrf.mxu0
        %v548 = vadd.f32 %v342, %v547
        %v549 = vpop.f32.mrf.mxu0
        %550 = vmatprep.mubr.f32.mxu0 0.0
        %551 = vmatmul.mubr.f32.gmra.mxu0 %v373
        %v552 = vpop.f32.mrf.mxu0
        %v553 = vadd.f32 %v342, %v552
        %v554 = vpop.f32.mrf.mxu0
        %555 = vmatprep.mubr.f32.mxu0 0.0
        %556 = vmatmul.mubr.f32.gmra.mxu0 %v376
        %v557 = vpop.f32.mrf.mxu0
        %v558 = vadd.f32 %v342, %v557
        %v559 = vpop.f32.mrf.mxu0
        %560 = vmatprep.mubr.f32.mxu0 0.0
        %561 = vmatmul.mubr.f32.gmra.mxu0 %v379
        %v562 = vpop.f32.mrf.mxu0
        %v563 = vadd.f32 %v342, %v562
        %v564 = vpop.f32.mrf.mxu0
        %565 = vmatprep.mubr.f32.mxu0 0.0
        %566 = vmatmul.mubr.f32.gmra.mxu0 %v382
        %v567 = vpop.f32.mrf.mxu0
        %v568 = vadd.f32 %v342, %v567
        %v569 = vpop.f32.mrf.mxu0
        %570 = vmatprep.mubr.f32.mxu0 0.0
        %571 = vmatmul.mubr.f32.gmra.mxu0 %v385
        %v572 = vpop.f32.mrf.mxu0
        %v573 = vadd.f32 %v342, %v572
        %v574 = vpop.f32.mrf.mxu0
        %575 = vmatprep.mubr.f32.mxu0 0.0
        %576 = vmatmul.mubr.f32.gmra.mxu0 %v388
        %v577 = vpop.f32.mrf.mxu0
        %v578 = vadd.f32 %v342, %v577
        %v579 = vpop.f32.mrf.mxu0
        %580 = vmatprep.mubr.f32.mxu0 0.0
        %581 = vmatmul.mubr.f32.gmra.mxu0 %v391
        %v582 = vpop.f32.mrf.mxu0
        %v583 = vadd.f32 %v342, %v582
        %v584 = vpop.f32.mrf.mxu0
        %585 = vmatprep.mubr.f32.mxu0 0.0
        %586 = vmatmul.mubr.f32.gmra.mxu0 %v394
        %v587 = vpop.f32.mrf.mxu0
        %v588 = vadd.f32 %v342, %v587
        %v589 = vpop.f32.mrf.mxu0
        %590 = vmatprep.mubr.f32.mxu0 0.0
        %591 = vmatmul.mubr.f32.gmra.mxu0 %v397
        %v592 = vpop.f32.mrf.mxu0
        %v593 = vadd.f32 %v342, %v592
        %v594 = vpop.f32.mrf.mxu0
        %595 = vmatprep.mubr.f32.mxu0 0.0
        %596 = vmatmul.mubr.f32.gmra.mxu0 %v400
        %v597 = vpop.f32.mrf.mxu0
        %v598 = vadd.f32 %v342, %v597
        %v599 = vpop.f32.mrf.mxu0
        %600 = vmatprep.mubr.f32.mxu0 0.0
        %601 = vmatmul.mubr.f32.gmra.mxu0 %v403
        %v602 = vpop.f32.mrf.mxu0
        %v603 = vadd.f32 %v342, %v602
        %v604 = vpop.f32.mrf.mxu0
        %605 = vmatprep.mubr.f32.mxu0 0.0
        %606 = vmatmul.mubr.f32.gmra.mxu0 %v406
        %v607 = vpop.f32.mrf.mxu0
        %v608 = vadd.f32 %v342, %v607
        %v609 = vpop.f32.mrf.mxu0
        %610 = vmatprep.mubr.f32.mxu0 0.0
        %611 = vmatmul.mubr.f32.gmra.mxu0 %v409
        %v612 = vpop.f32.mrf.mxu0
        %v613 = vadd.f32 %v342, %v612
        %v614 = vpop.f32.mrf.mxu0
        %615 = vmatprep.mubr.f32.mxu0 0.0
        %616 = vmatmul.mubr.f32.gmra.mxu0 %v412
        %v617 = vpop.f32.mrf.mxu0
        %v618 = vadd.f32 %v342, %v617
        %v619 = vpop.f32.mrf.mxu0
        %620 = vmatprep.mubr.f32.mxu0 0.0
        %621 = vmatmul.mubr.f32.gmra.mxu0 %v415
        %v622 = vpop.f32.mrf.mxu0
        %v623 = vadd.f32 %v342, %v622
        %v624 = vpop.f32.mrf.mxu0
        %625 = vmatprep.mubr.f32.mxu0 0.0
        %626 = vmatmul.mubr.f32.gmra.mxu0 %v418
        %v627 = vpop.f32.mrf.mxu0
        %v628 = vadd.f32 %v342, %v627
        %v629 = vpop.f32.mrf.mxu0
        %630 = vmatprep.mubr.f32.mxu0 0.0
        %631 = vmatmul.mubr.f32.gmra.mxu0 %v421
        %v632 = vpop.f32.mrf.mxu0
        %v633 = vadd.f32 %v342, %v632
        %v634 = vpop.f32.mrf.mxu0
        %635 = vmatprep.mubr.f32.mxu0 0.0
        %636 = vmatmul.mubr.f32.gmra.mxu0 %v424
        %v637 = vpop.f32.mrf.mxu0
        %v638 = vadd.f32 %v342, %v637
        %v639 = vpop.f32.mrf.mxu0
        %640 = vmatprep.mubr.f32.mxu0 0.0
        %641 = vmatmul.mubr.f32.gmra.mxu0 %v427
        %v642 = vpop.f32.mrf.mxu0
        %v643 = vadd.f32 %v342, %v642
        %v644 = vpop.f32.mrf.mxu0
        %645 = vmatprep.mubr.f32.mxu0 0.0
        %646 = vmatmul.mubr.f32.gmra.mxu0 %v430
        %v647 = vpop.f32.mrf.mxu0
        %v648 = vadd.f32 %v342, %v647
        %v649 = vpop.f32.mrf.mxu0
        %650 = vmatprep.mubr.f32.mxu0 0.0
        %651 = vmatmul.mubr.f32.gmra.mxu0 %v433
        %v652 = vpop.f32.mrf.mxu0
        %v653 = vadd.f32 %v342, %v652
        %v654 = vpop.f32.mrf.mxu0
        %655 = vmatprep.mubr.f32.mxu0 0.0
        %656 = vmatmul.mubr.f32.gmra.mxu0 %v436
        %v657 = vpop.f32.mrf.mxu0
        %v658 = vadd.f32 %v342, %v657
        %v659 = vpop.f32.mrf.mxu0
        %660 = vmatprep.mubr.f32.mxu0 0.0
        %661 = vmatmul.mubr.f32.gmra.mxu0 %v439
        %v662 = vpop.f32.mrf.mxu0
        %v663 = vadd.f32 %v342, %v662
        %v664 = vpop.f32.mrf.mxu0
        %665 = vdwg.mxu0
        %v666 = vmax.f32 %v508, 0.0
        %v667 = vmax.f32 %v513, 0.0
        %v668 = vmax.f32 %v518, 0.0
        %v669 = vmax.f32 %v523, 0.0
        %v670 = vmax.f32 %v528, 0.0
        %v671 = vmax.f32 %v533, 0.0
        %v672 = vmax.f32 %v538, 0.0
        %v673 = vmax.f32 %v543, 0.0
        %v674 = vmax.f32 %v548, 0.0
        %v675 = vmax.f32 %v553, 0.0
        %v676 = vmax.f32 %v558, 0.0
        %v677 = vmax.f32 %v563, 0.0
        %v678 = vmax.f32 %v568, 0.0
        %v679 = vmax.f32 %v573, 0.0
        %v680 = vmax.f32 %v578, 0.0
        %v681 = vmax.f32 %v583, 0.0
        %v682 = vmax.f32 %v588, 0.0
        %v683 = vmax.f32 %v593, 0.0
        %v684 = vmax.f32 %v598, 0.0
        %v685 = vmax.f32 %v603, 0.0
        %v686 = vmax.f32 %v608, 0.0
        %v687 = vmax.f32 %v613, 0.0
        %v688 = vmax.f32 %v618, 0.0
        %v689 = vmax.f32 %v623, 0.0
        %v690 = vmax.f32 %v628, 0.0
        %v691 = vmax.f32 %v633, 0.0
        %v692 = vmax.f32 %v638, 0.0
        %v693 = vmax.f32 %v643, 0.0
        %v694 = vmax.f32 %v648, 0.0
        %v695 = vmax.f32 %v653, 0.0
        %v696 = vmax.f32 %v658, 0.0
        %v697 = vmax.f32 %v663, 0.0
        %v698 = vld [vmem:[%s3] sm:$0xff]
        %v699 = vld [vmem:[%s3 + $0x8] sm:$0xff]
        %v700 = vld [vmem:[%s3 + $0x10] sm:$0xff]
        %v701 = vld [vmem:[%s3 + $0x18] sm:$0xff]
        %v702 = vld [vmem:[%s3 + $0x20] sm:$0xff]
        %v703 = vld [vmem:[%s3 + $0x28] sm:$0xff]
        %v704 = vld [vmem:[%s3 + $0x30] sm:$0xff]
        %v705 = vld [vmem:[%s3 + $0x38] sm:$0xff]
        %v706 = vld [vmem:[%s4] sm:$0x1]
        %v708 = vlaneseq
        %v709 = vshrl.u32 %v708, 7
        %v710 = vsub.s32 0, %v709
        %v711 = vrot.slane %v706, %v710
        %vm713 = vcmask 523264
        %v715 = vsel %vm713, %v666, 0
        %v718 = vsel %vm713, %v667, 0
        %v721 = vsel %vm713, %v668, 0
        %v724 = vsel %vm713, %v669, 0
        %v727 = vsel %vm713, %v670, 0
        %v730 = vsel %vm713, %v671, 0
        %v733 = vsel %vm713, %v672, 0
        %v736 = vsel %vm713, %v673, 0
        %v739 = vsel %vm713, %v674, 0
        %v742 = vsel %vm713, %v675, 0
        %v745 = vsel %vm713, %v676, 0
        %v748 = vsel %vm713, %v677, 0
        %v751 = vsel %vm713, %v678, 0
        %v754 = vsel %vm713, %v679, 0
        %v757 = vsel %vm713, %v680, 0
        %v760 = vsel %vm713, %v681, 0
        %v763 = vsel %vm713, %v682, 0
        %v766 = vsel %vm713, %v683, 0
        %v769 = vsel %vm713, %v684, 0
        %v772 = vsel %vm713, %v685, 0
        %v775 = vsel %vm713, %v686, 0
        %v778 = vsel %vm713, %v687, 0
        %v781 = vsel %vm713, %v688, 0
        %v784 = vsel %vm713, %v689, 0
        %v787 = vsel %vm713, %v690, 0
        %v790 = vsel %vm713, %v691, 0
        %v793 = vsel %vm713, %v692, 0
        %v796 = vsel %vm713, %v693, 0
        %v799 = vsel %vm713, %v694, 0
        %v802 = vsel %vm713, %v695, 0
        %v805 = vsel %vm713, %v696, 0
        %v808 = vsel %vm713, %v697, 0
        %810 = vmatprep.subr.mxu0 0.0
        %811 = vmatpush1.msra.mxu0 0.0
        %812 = vmatprep.subr.mxu0 0.0
        %813 = vmatpush1.msra.mxu0 0.0
        %814 = vmatprep.subr.mxu0 0.0
        %815 = vmatpush1.msra.mxu0 0.0
        %816 = vmatprep.subr.mxu0 0.0
        %817 = vmatpush1.msra.mxu0 0.0
        %818 = vmatprep.subr.mxu0 0.0
        %819 = vmatpush1.msra.mxu0 0.0
        %820 = vmatprep.subr.mxu0 0.0
        %821 = vmatpush1.msra.mxu0 0.0
        %822 = vmatprep.subr.mxu0 0.0
        %823 = vmatpush1.msra.mxu0 0.0
        %824 = vmatprep.subr.mxu0 0.0
        %825 = vmatpush1.msra.mxu0 0.0
        %826 = vmatprep.subr.mxu0 0.0
        %827 = vmatpush1.msra.mxu0 %v705
        %828 = vmatprep.subr.mxu0 0.0
        %829 = vmatpush1.msra.mxu0 %v704
        %830 = vmatprep.subr.mxu0 0.0
        %831 = vmatpush1.msra.mxu0 %v703
        %832 = vmatprep.subr.mxu0 0.0
        %833 = vmatpush1.msra.mxu0 %v702
        %834 = vmatprep.subr.mxu0 0.0
        %835 = vmatpush1.msra.mxu0 %v701
        %836 = vmatprep.subr.mxu0 0.0
        %837 = vmatpush1.msra.mxu0 %v700
        %838 = vmatprep.subr.mxu0 0.0
        %839 = vmatpush1.msra.mxu0 %v699
        %840 = vmatprep.subr.mxu0 0.0
        %841 = vmatpush1.msra.mxu0 %v698
        %842 = vmatprep.subr.mxu0 0.0
        %843 = vmatpush2.msra.mxu0 0.0
        %844 = vmatprep.subr.mxu0 0.0
        %845 = vmatpush2.msra.mxu0 0.0
        %846 = vmatprep.subr.mxu0 0.0
        %847 = vmatpush2.msra.mxu0 0.0
        %848 = vmatprep.subr.mxu0 0.0
        %849 = vmatpush2.msra.mxu0 0.0
        %850 = vmatprep.subr.mxu0 0.0
        %851 = vmatpush2.msra.mxu0 0.0
        %852 = vmatprep.subr.mxu0 0.0
        %853 = vmatpush2.msra.mxu0 0.0
        %854 = vmatprep.subr.mxu0 0.0
        %855 = vmatpush2.msra.mxu0 0.0
        %856 = vmatprep.subr.mxu0 0.0
        %857 = vmatpush2.msra.mxu0 0.0
        %858 = vmatprep.subr.mxu0 0.0
        %859 = vmatpush2.msra.mxu0 0.0
        %860 = vmatprep.subr.mxu0 0.0
        %861 = vmatpush2.msra.mxu0 0.0
        %862 = vmatprep.subr.mxu0 0.0
        %863 = vmatpush2.msra.mxu0 0.0
        %864 = vmatprep.subr.mxu0 0.0
        %865 = vmatpush2.msra.mxu0 0.0
        %866 = vmatprep.subr.mxu0 0.0
        %867 = vmatpush2.msra.mxu0 0.0
        %868 = vmatprep.subr.mxu0 0.0
        %869 = vmatpush2.msra.mxu0 0.0
        %870 = vmatprep.subr.mxu0 0.0
        %871 = vmatpush2.msra.mxu0 0.0
        %872 = vmatprep.subr.mxu0 0.0
        %873 = vmatpush2.msra.mxu0 0.0
        %874 = vmatprep.mubr.f32.mxu0 0.0
        %875 = vmatmul.mubr.f32.gmra.mxu0 %v715
        %v876 = vpop.f32.mrf.mxu0
        %v877 = vadd.f32 %v711, %v876
        %v878 = vpop.f32.mrf.mxu0
        %879 = vmatprep.mubr.f32.mxu0 0.0
        %880 = vmatmul.mubr.f32.gmra.mxu0 %v718
        %v881 = vpop.f32.mrf.mxu0
        %v882 = vadd.f32 %v711, %v881
        %v883 = vpop.f32.mrf.mxu0
        %884 = vmatprep.mubr.f32.mxu0 0.0
        %885 = vmatmul.mubr.f32.gmra.mxu0 %v721
        %v886 = vpop.f32.mrf.mxu0
        %v887 = vadd.f32 %v711, %v886
        %v888 = vpop.f32.mrf.mxu0
        %889 = vmatprep.mubr.f32.mxu0 0.0
        %890 = vmatmul.mubr.f32.gmra.mxu0 %v724
        %v891 = vpop.f32.mrf.mxu0
        %v892 = vadd.f32 %v711, %v891
        %v893 = vpop.f32.mrf.mxu0
        %894 = vmatprep.mubr.f32.mxu0 0.0
        %895 = vmatmul.mubr.f32.gmra.mxu0 %v727
        %v896 = vpop.f32.mrf.mxu0
        %v897 = vadd.f32 %v711, %v896
        %v898 = vpop.f32.mrf.mxu0
        %899 = vmatprep.mubr.f32.mxu0 0.0
        %900 = vmatmul.mubr.f32.gmra.mxu0 %v730
        %v901 = vpop.f32.mrf.mxu0
        %v902 = vadd.f32 %v711, %v901
        %v903 = vpop.f32.mrf.mxu0
        %904 = vmatprep.mubr.f32.mxu0 0.0
        %905 = vmatmul.mubr.f32.gmra.mxu0 %v733
        %v906 = vpop.f32.mrf.mxu0
        %v907 = vadd.f32 %v711, %v906
        %v908 = vpop.f32.mrf.mxu0
        %909 = vmatprep.mubr.f32.mxu0 0.0
        %910 = vmatmul.mubr.f32.gmra.mxu0 %v736
        %v911 = vpop.f32.mrf.mxu0
        %v912 = vadd.f32 %v711, %v911
        %v913 = vpop.f32.mrf.mxu0
        %914 = vmatprep.mubr.f32.mxu0 0.0
        %915 = vmatmul.mubr.f32.gmra.mxu0 %v739
        %v916 = vpop.f32.mrf.mxu0
        %v917 = vadd.f32 %v711, %v916
        %v918 = vpop.f32.mrf.mxu0
        %919 = vmatprep.mubr.f32.mxu0 0.0
        %920 = vmatmul.mubr.f32.gmra.mxu0 %v742
        %v921 = vpop.f32.mrf.mxu0
        %v922 = vadd.f32 %v711, %v921
        %v923 = vpop.f32.mrf.mxu0
        %924 = vmatprep.mubr.f32.mxu0 0.0
        %925 = vmatmul.mubr.f32.gmra.mxu0 %v745
        %v926 = vpop.f32.mrf.mxu0
        %v927 = vadd.f32 %v711, %v926
        %v928 = vpop.f32.mrf.mxu0
        %929 = vmatprep.mubr.f32.mxu0 0.0
        %930 = vmatmul.mubr.f32.gmra.mxu0 %v748
        %v931 = vpop.f32.mrf.mxu0
        %v932 = vadd.f32 %v711, %v931
        %v933 = vpop.f32.mrf.mxu0
        %934 = vmatprep.mubr.f32.mxu0 0.0
        %935 = vmatmul.mubr.f32.gmra.mxu0 %v751
        %v936 = vpop.f32.mrf.mxu0
        %v937 = vadd.f32 %v711, %v936
        %v938 = vpop.f32.mrf.mxu0
        %939 = vmatprep.mubr.f32.mxu0 0.0
        %940 = vmatmul.mubr.f32.gmra.mxu0 %v754
        %v941 = vpop.f32.mrf.mxu0
        %v942 = vadd.f32 %v711, %v941
        %v943 = vpop.f32.mrf.mxu0
        %944 = vmatprep.mubr.f32.mxu0 0.0
        %945 = vmatmul.mubr.f32.gmra.mxu0 %v757
        %v946 = vpop.f32.mrf.mxu0
        %v947 = vadd.f32 %v711, %v946
        %v948 = vpop.f32.mrf.mxu0
        %949 = vmatprep.mubr.f32.mxu0 0.0
        %950 = vmatmul.mubr.f32.gmra.mxu0 %v760
        %v951 = vpop.f32.mrf.mxu0
        %v952 = vadd.f32 %v711, %v951
        %v953 = vpop.f32.mrf.mxu0
        %954 = vmatprep.mubr.f32.mxu0 0.0
        %955 = vmatmul.mubr.f32.gmra.mxu0 %v763
        %v956 = vpop.f32.mrf.mxu0
        %v957 = vadd.f32 %v711, %v956
        %v958 = vpop.f32.mrf.mxu0
        %959 = vmatprep.mubr.f32.mxu0 0.0
        %960 = vmatmul.mubr.f32.gmra.mxu0 %v766
        %v961 = vpop.f32.mrf.mxu0
        %v962 = vadd.f32 %v711, %v961
        %v963 = vpop.f32.mrf.mxu0
        %964 = vmatprep.mubr.f32.mxu0 0.0
        %965 = vmatmul.mubr.f32.gmra.mxu0 %v769
        %v966 = vpop.f32.mrf.mxu0
        %v967 = vadd.f32 %v711, %v966
        %v968 = vpop.f32.mrf.mxu0
        %969 = vmatprep.mubr.f32.mxu0 0.0
        %970 = vmatmul.mubr.f32.gmra.mxu0 %v772
        %v971 = vpop.f32.mrf.mxu0
        %v972 = vadd.f32 %v711, %v971
        %v973 = vpop.f32.mrf.mxu0
        %974 = vmatprep.mubr.f32.mxu0 0.0
        %975 = vmatmul.mubr.f32.gmra.mxu0 %v775
        %v976 = vpop.f32.mrf.mxu0
        %v977 = vadd.f32 %v711, %v976
        %v978 = vpop.f32.mrf.mxu0
        %979 = vmatprep.mubr.f32.mxu0 0.0
        %980 = vmatmul.mubr.f32.gmra.mxu0 %v778
        %v981 = vpop.f32.mrf.mxu0
        %v982 = vadd.f32 %v711, %v981
        %v983 = vpop.f32.mrf.mxu0
        %984 = vmatprep.mubr.f32.mxu0 0.0
        %985 = vmatmul.mubr.f32.gmra.mxu0 %v781
        %v986 = vpop.f32.mrf.mxu0
        %v987 = vadd.f32 %v711, %v986
        %v988 = vpop.f32.mrf.mxu0
        %989 = vmatprep.mubr.f32.mxu0 0.0
        %990 = vmatmul.mubr.f32.gmra.mxu0 %v784
        %v991 = vpop.f32.mrf.mxu0
        %v992 = vadd.f32 %v711, %v991
        %v993 = vpop.f32.mrf.mxu0
        %994 = vmatprep.mubr.f32.mxu0 0.0
        %995 = vmatmul.mubr.f32.gmra.mxu0 %v787
        %v996 = vpop.f32.mrf.mxu0
        %v997 = vadd.f32 %v711, %v996
        %v998 = vpop.f32.mrf.mxu0
        %999 = vmatprep.mubr.f32.mxu0 0.0
        %1000 = vmatmul.mubr.f32.gmra.mxu0 %v790
        %v1001 = vpop.f32.mrf.mxu0
        %v1002 = vadd.f32 %v711, %v1001
        %v1003 = vpop.f32.mrf.mxu0
        %1004 = vmatprep.mubr.f32.mxu0 0.0
        %1005 = vmatmul.mubr.f32.gmra.mxu0 %v793
        %v1006 = vpop.f32.mrf.mxu0
        %v1007 = vadd.f32 %v711, %v1006
        %v1008 = vpop.f32.mrf.mxu0
        %1009 = vmatprep.mubr.f32.mxu0 0.0
        %1010 = vmatmul.mubr.f32.gmra.mxu0 %v796
        %v1011 = vpop.f32.mrf.mxu0
        %v1012 = vadd.f32 %v711, %v1011
        %v1013 = vpop.f32.mrf.mxu0
        %1014 = vmatprep.mubr.f32.mxu0 0.0
        %1015 = vmatmul.mubr.f32.gmra.mxu0 %v799
        %v1016 = vpop.f32.mrf.mxu0
        %v1017 = vadd.f32 %v711, %v1016
        %v1018 = vpop.f32.mrf.mxu0
        %1019 = vmatprep.mubr.f32.mxu0 0.0
        %1020 = vmatmul.mubr.f32.gmra.mxu0 %v802
        %v1021 = vpop.f32.mrf.mxu0
        %v1022 = vadd.f32 %v711, %v1021
        %v1023 = vpop.f32.mrf.mxu0
        %1024 = vmatprep.mubr.f32.mxu0 0.0
        %1025 = vmatmul.mubr.f32.gmra.mxu0 %v805
        %v1026 = vpop.f32.mrf.mxu0
        %v1027 = vadd.f32 %v711, %v1026
        %v1028 = vpop.f32.mrf.mxu0
        %1029 = vmatprep.mubr.f32.mxu0 0.0
        %1030 = vmatmul.mubr.f32.gmra.mxu0 %v808
        %v1031 = vpop.f32.mrf.mxu0
        %v1032 = vadd.f32 %v711, %v1031
        %v1033 = vpop.f32.mrf.mxu0
        %1034 = vdwg.mxu0
        %v1035 = vmax.f32 %v877, 0.0
        %v1036 = vmax.f32 %v882, 0.0
        %v1037 = vmax.f32 %v887, 0.0
        %v1038 = vmax.f32 %v892, 0.0
        %v1039 = vmax.f32 %v897, 0.0
        %v1040 = vmax.f32 %v902, 0.0
        %v1041 = vmax.f32 %v907, 0.0
        %v1042 = vmax.f32 %v912, 0.0
        %v1043 = vmax.f32 %v917, 0.0
        %v1044 = vmax.f32 %v922, 0.0
        %v1045 = vmax.f32 %v927, 0.0
        %v1046 = vmax.f32 %v932, 0.0
        %v1047 = vmax.f32 %v937, 0.0
        %v1048 = vmax.f32 %v942, 0.0
        %v1049 = vmax.f32 %v947, 0.0
        %v1050 = vmax.f32 %v952, 0.0
        %v1051 = vmax.f32 %v957, 0.0
        %v1052 = vmax.f32 %v962, 0.0
        %v1053 = vmax.f32 %v967, 0.0
        %v1054 = vmax.f32 %v972, 0.0
        %v1055 = vmax.f32 %v977, 0.0
        %v1056 = vmax.f32 %v982, 0.0
        %v1057 = vmax.f32 %v987, 0.0
        %v1058 = vmax.f32 %v992, 0.0
        %v1059 = vmax.f32 %v997, 0.0
        %v1060 = vmax.f32 %v1002, 0.0
        %v1061 = vmax.f32 %v1007, 0.0
        %v1062 = vmax.f32 %v1012, 0.0
        %v1063 = vmax.f32 %v1017, 0.0
        %v1064 = vmax.f32 %v1022, 0.0
        %v1065 = vmax.f32 %v1027, 0.0
        %v1066 = vmax.f32 %v1032, 0.0
        %v1067 = vld [vmem:[%s5] sm:$0xff]
        %v1068 = vld [vmem:[%s5 + $0x8] sm:$0xff]
        %v1069 = vld [vmem:[%s5 + $0x10] sm:$0xff]
        %v1070 = vld [vmem:[%s5 + $0x18] sm:$0xff]
        %v1071 = vld [vmem:[%s5 + $0x20] sm:$0xff]
        %v1072 = vld [vmem:[%s5 + $0x28] sm:$0xff]
        %v1073 = vld [vmem:[%s5 + $0x30] sm:$0xff]
        %v1074 = vld [vmem:[%s5 + $0x38] sm:$0xff]
        %s1075 = sld [smem:[#allocation2]]
        %v1076 = vstv %s1075
        %v1078 = vsel %vm713, %v1035, 0
        %v1081 = vsel %vm713, %v1036, 0
        %v1084 = vsel %vm713, %v1037, 0
        %v1087 = vsel %vm713, %v1038, 0
        %v1090 = vsel %vm713, %v1039, 0
        %v1093 = vsel %vm713, %v1040, 0
        %v1096 = vsel %vm713, %v1041, 0
        %v1099 = vsel %vm713, %v1042, 0
        %v1102 = vsel %vm713, %v1043, 0
        %v1105 = vsel %vm713, %v1044, 0
        %v1108 = vsel %vm713, %v1045, 0
        %v1111 = vsel %vm713, %v1046, 0
        %v1114 = vsel %vm713, %v1047, 0
        %v1117 = vsel %vm713, %v1048, 0
        %v1120 = vsel %vm713, %v1049, 0
        %v1123 = vsel %vm713, %v1050, 0
        %v1126 = vsel %vm713, %v1051, 0
        %v1129 = vsel %vm713, %v1052, 0
        %v1132 = vsel %vm713, %v1053, 0
        %v1135 = vsel %vm713, %v1054, 0
        %v1138 = vsel %vm713, %v1055, 0
        %v1141 = vsel %vm713, %v1056, 0
        %v1144 = vsel %vm713, %v1057, 0
        %v1147 = vsel %vm713, %v1058, 0
        %v1150 = vsel %vm713, %v1059, 0
        %v1153 = vsel %vm713, %v1060, 0
        %v1156 = vsel %vm713, %v1061, 0
        %v1159 = vsel %vm713, %v1062, 0
        %v1162 = vsel %vm713, %v1063, 0
        %v1165 = vsel %vm713, %v1064, 0
        %v1168 = vsel %vm713, %v1065, 0
        %v1171 = vsel %vm713, %v1066, 0
        %1173 = vmatprep.subr.mxu0 0.0
        %1174 = vmatpush1.msra.mxu0 0.0
        %1175 = vmatprep.subr.mxu0 0.0
        %1176 = vmatpush1.msra.mxu0 0.0
        %1177 = vmatprep.subr.mxu0 0.0
        %1178 = vmatpush1.msra.mxu0 0.0
        %1179 = vmatprep.subr.mxu0 0.0
        %1180 = vmatpush1.msra.mxu0 0.0
        %1181 = vmatprep.subr.mxu0 0.0
        %1182 = vmatpush1.msra.mxu0 0.0
        %1183 = vmatprep.subr.mxu0 0.0
        %1184 = vmatpush1.msra.mxu0 0.0
        %1185 = vmatprep.subr.mxu0 0.0
        %1186 = vmatpush1.msra.mxu0 0.0
        %1187 = vmatprep.subr.mxu0 0.0
        %1188 = vmatpush1.msra.mxu0 0.0
        %1189 = vmatprep.subr.mxu0 0.0
        %1190 = vmatpush1.msra.mxu0 %v1074
        %1191 = vmatprep.subr.mxu0 0.0
        %1192 = vmatpush1.msra.mxu0 %v1073
        %1193 = vmatprep.subr.mxu0 0.0
        %1194 = vmatpush1.msra.mxu0 %v1072
        %1195 = vmatprep.subr.mxu0 0.0
        %1196 = vmatpush1.msra.mxu0 %v1071
        %1197 = vmatprep.subr.mxu0 0.0
        %1198 = vmatpush1.msra.mxu0 %v1070
        %1199 = vmatprep.subr.mxu0 0.0
        %1200 = vmatpush1.msra.mxu0 %v1069
        %1201 = vmatprep.subr.mxu0 0.0
        %1202 = vmatpush1.msra.mxu0 %v1068
        %1203 = vmatprep.subr.mxu0 0.0
        %1204 = vmatpush1.msra.mxu0 %v1067
        %1205 = vmatprep.subr.mxu0 0.0
        %1206 = vmatpush2.msra.mxu0 0.0
        %1207 = vmatprep.subr.mxu0 0.0
        %1208 = vmatpush2.msra.mxu0 0.0
        %1209 = vmatprep.subr.mxu0 0.0
        %1210 = vmatpush2.msra.mxu0 0.0
        %1211 = vmatprep.subr.mxu0 0.0
        %1212 = vmatpush2.msra.mxu0 0.0
        %1213 = vmatprep.subr.mxu0 0.0
        %1214 = vmatpush2.msra.mxu0 0.0
        %1215 = vmatprep.subr.mxu0 0.0
        %1216 = vmatpush2.msra.mxu0 0.0
        %1217 = vmatprep.subr.mxu0 0.0
        %1218 = vmatpush2.msra.mxu0 0.0
        %1219 = vmatprep.subr.mxu0 0.0
        %1220 = vmatpush2.msra.mxu0 0.0
        %1221 = vmatprep.subr.mxu0 0.0
        %1222 = vmatpush2.msra.mxu0 0.0
        %1223 = vmatprep.subr.mxu0 0.0
        %1224 = vmatpush2.msra.mxu0 0.0
        %1225 = vmatprep.subr.mxu0 0.0
        %1226 = vmatpush2.msra.mxu0 0.0
        %1227 = vmatprep.subr.mxu0 0.0
        %1228 = vmatpush2.msra.mxu0 0.0
        %1229 = vmatprep.subr.mxu0 0.0
        %1230 = vmatpush2.msra.mxu0 0.0
        %1231 = vmatprep.subr.mxu0 0.0
        %1232 = vmatpush2.msra.mxu0 0.0
        %1233 = vmatprep.subr.mxu0 0.0
        %1234 = vmatpush2.msra.mxu0 0.0
        %1235 = vmatprep.subr.mxu0 0.0
        %1236 = vmatpush2.msra.mxu0 0.0
        %1237 = vmatprep.mubr.f32.mxu0 0.0
        %1238 = vmatmul.mubr.f32.gmra.mxu0 %v1078
        %v1239 = vpop.f32.mrf.mxu0
        %v1240 = vadd.f32 %v1076, %v1239
        %v1241 = vpop.f32.mrf.mxu0
        %1242 = vmatprep.mubr.f32.mxu0 0.0
        %1243 = vmatmul.mubr.f32.gmra.mxu0 %v1081
        %v1244 = vpop.f32.mrf.mxu0
        %v1245 = vadd.f32 %v1076, %v1244
        %v1246 = vpop.f32.mrf.mxu0
        %1247 = vmatprep.mubr.f32.mxu0 0.0
        %1248 = vmatmul.mubr.f32.gmra.mxu0 %v1084
        %v1249 = vpop.f32.mrf.mxu0
        %v1250 = vadd.f32 %v1076, %v1249
        %v1251 = vpop.f32.mrf.mxu0
        %1252 = vmatprep.mubr.f32.mxu0 0.0
        %1253 = vmatmul.mubr.f32.gmra.mxu0 %v1087
        %v1254 = vpop.f32.mrf.mxu0
        %v1255 = vadd.f32 %v1076, %v1254
        %v1256 = vpop.f32.mrf.mxu0
        %1257 = vmatprep.mubr.f32.mxu0 0.0
        %1258 = vmatmul.mubr.f32.gmra.mxu0 %v1090
        %v1259 = vpop.f32.mrf.mxu0
        %v1260 = vadd.f32 %v1076, %v1259
        %v1261 = vpop.f32.mrf.mxu0
        %1262 = vmatprep.mubr.f32.mxu0 0.0
        %1263 = vmatmul.mubr.f32.gmra.mxu0 %v1093
        %v1264 = vpop.f32.mrf.mxu0
        %v1265 = vadd.f32 %v1076, %v1264
        %v1266 = vpop.f32.mrf.mxu0
        %1267 = vmatprep.mubr.f32.mxu0 0.0
        %1268 = vmatmul.mubr.f32.gmra.mxu0 %v1096
        %v1269 = vpop.f32.mrf.mxu0
        %v1270 = vadd.f32 %v1076, %v1269
        %v1271 = vpop.f32.mrf.mxu0
        %1272 = vmatprep.mubr.f32.mxu0 0.0
        %1273 = vmatmul.mubr.f32.gmra.mxu0 %v1099
        %v1274 = vpop.f32.mrf.mxu0
        %v1275 = vadd.f32 %v1076, %v1274
        %v1276 = vpop.f32.mrf.mxu0
        %1277 = vmatprep.mubr.f32.mxu0 0.0
        %1278 = vmatmul.mubr.f32.gmra.mxu0 %v1102
        %v1279 = vpop.f32.mrf.mxu0
        %v1280 = vadd.f32 %v1076, %v1279
        %v1281 = vpop.f32.mrf.mxu0
        %1282 = vmatprep.mubr.f32.mxu0 0.0
        %1283 = vmatmul.mubr.f32.gmra.mxu0 %v1105
        %v1284 = vpop.f32.mrf.mxu0
        %v1285 = vadd.f32 %v1076, %v1284
        %v1286 = vpop.f32.mrf.mxu0
        %1287 = vmatprep.mubr.f32.mxu0 0.0
        %1288 = vmatmul.mubr.f32.gmra.mxu0 %v1108
        %v1289 = vpop.f32.mrf.mxu0
        %v1290 = vadd.f32 %v1076, %v1289
        %v1291 = vpop.f32.mrf.mxu0
        %1292 = vmatprep.mubr.f32.mxu0 0.0
        %1293 = vmatmul.mubr.f32.gmra.mxu0 %v1111
        %v1294 = vpop.f32.mrf.mxu0
        %v1295 = vadd.f32 %v1076, %v1294
        %v1296 = vpop.f32.mrf.mxu0
        %1297 = vmatprep.mubr.f32.mxu0 0.0
        %1298 = vmatmul.mubr.f32.gmra.mxu0 %v1114
        %v1299 = vpop.f32.mrf.mxu0
        %v1300 = vadd.f32 %v1076, %v1299
        %v1301 = vpop.f32.mrf.mxu0
        %1302 = vmatprep.mubr.f32.mxu0 0.0
        %1303 = vmatmul.mubr.f32.gmra.mxu0 %v1117
        %v1304 = vpop.f32.mrf.mxu0
        %v1305 = vadd.f32 %v1076, %v1304
        %v1306 = vpop.f32.mrf.mxu0
        %1307 = vmatprep.mubr.f32.mxu0 0.0
        %1308 = vmatmul.mubr.f32.gmra.mxu0 %v1120
        %v1309 = vpop.f32.mrf.mxu0
        %v1310 = vadd.f32 %v1076, %v1309
        %v1311 = vpop.f32.mrf.mxu0
        %1312 = vmatprep.mubr.f32.mxu0 0.0
        %1313 = vmatmul.mubr.f32.gmra.mxu0 %v1123
        %v1314 = vpop.f32.mrf.mxu0
        %v1315 = vadd.f32 %v1076, %v1314
        %v1316 = vpop.f32.mrf.mxu0
        %1317 = vmatprep.mubr.f32.mxu0 0.0
        %1318 = vmatmul.mubr.f32.gmra.mxu0 %v1126
        %v1319 = vpop.f32.mrf.mxu0
        %v1320 = vadd.f32 %v1076, %v1319
        %v1321 = vpop.f32.mrf.mxu0
        %1322 = vmatprep.mubr.f32.mxu0 0.0
        %1323 = vmatmul.mubr.f32.gmra.mxu0 %v1129
        %v1324 = vpop.f32.mrf.mxu0
        %v1325 = vadd.f32 %v1076, %v1324
        %v1326 = vpop.f32.mrf.mxu0
        %1327 = vmatprep.mubr.f32.mxu0 0.0
        %1328 = vmatmul.mubr.f32.gmra.mxu0 %v1132
        %v1329 = vpop.f32.mrf.mxu0
        %v1330 = vadd.f32 %v1076, %v1329
        %v1331 = vpop.f32.mrf.mxu0
        %1332 = vmatprep.mubr.f32.mxu0 0.0
        %1333 = vmatmul.mubr.f32.gmra.mxu0 %v1135
        %v1334 = vpop.f32.mrf.mxu0
        %v1335 = vadd.f32 %v1076, %v1334
        %v1336 = vpop.f32.mrf.mxu0
        %1337 = vmatprep.mubr.f32.mxu0 0.0
        %1338 = vmatmul.mubr.f32.gmra.mxu0 %v1138
        %v1339 = vpop.f32.mrf.mxu0
        %v1340 = vadd.f32 %v1076, %v1339
        %v1341 = vpop.f32.mrf.mxu0
        %1342 = vmatprep.mubr.f32.mxu0 0.0
        %1343 = vmatmul.mubr.f32.gmra.mxu0 %v1141
        %v1344 = vpop.f32.mrf.mxu0
        %v1345 = vadd.f32 %v1076, %v1344
        %v1346 = vpop.f32.mrf.mxu0
        %1347 = vmatprep.mubr.f32.mxu0 0.0
        %1348 = vmatmul.mubr.f32.gmra.mxu0 %v1144
        %v1349 = vpop.f32.mrf.mxu0
        %v1350 = vadd.f32 %v1076, %v1349
        %v1351 = vpop.f32.mrf.mxu0
        %1352 = vmatprep.mubr.f32.mxu0 0.0
        %1353 = vmatmul.mubr.f32.gmra.mxu0 %v1147
        %v1354 = vpop.f32.mrf.mxu0
        %v1355 = vadd.f32 %v1076, %v1354
        %v1356 = vpop.f32.mrf.mxu0
        %1357 = vmatprep.mubr.f32.mxu0 0.0
        %1358 = vmatmul.mubr.f32.gmra.mxu0 %v1150
        %v1359 = vpop.f32.mrf.mxu0
        %v1360 = vadd.f32 %v1076, %v1359
        %v1361 = vpop.f32.mrf.mxu0
        %1362 = vmatprep.mubr.f32.mxu0 0.0
        %1363 = vmatmul.mubr.f32.gmra.mxu0 %v1153
        %v1364 = vpop.f32.mrf.mxu0
        %v1365 = vadd.f32 %v1076, %v1364
        %v1366 = vpop.f32.mrf.mxu0
        %1367 = vmatprep.mubr.f32.mxu0 0.0
        %1368 = vmatmul.mubr.f32.gmra.mxu0 %v1156
        %v1369 = vpop.f32.mrf.mxu0
        %v1370 = vadd.f32 %v1076, %v1369
        %v1371 = vpop.f32.mrf.mxu0
        %1372 = vmatprep.mubr.f32.mxu0 0.0
        %1373 = vmatmul.mubr.f32.gmra.mxu0 %v1159
        %v1374 = vpop.f32.mrf.mxu0
        %v1375 = vadd.f32 %v1076, %v1374
        %v1376 = vpop.f32.mrf.mxu0
        %1377 = vmatprep.mubr.f32.mxu0 0.0
        %1378 = vmatmul.mubr.f32.gmra.mxu0 %v1162
        %v1379 = vpop.f32.mrf.mxu0
        %v1380 = vadd.f32 %v1076, %v1379
        %v1381 = vpop.f32.mrf.mxu0
        %1382 = vmatprep.mubr.f32.mxu0 0.0
        %1383 = vmatmul.mubr.f32.gmra.mxu0 %v1165
        %v1384 = vpop.f32.mrf.mxu0
        %v1385 = vadd.f32 %v1076, %v1384
        %v1386 = vpop.f32.mrf.mxu0
        %1387 = vmatprep.mubr.f32.mxu0 0.0
        %1388 = vmatmul.mubr.f32.gmra.mxu0 %v1168
        %v1389 = vpop.f32.mrf.mxu0
        %v1390 = vadd.f32 %v1076, %v1389
        %v1391 = vpop.f32.mrf.mxu0
        %1392 = vmatprep.mubr.f32.mxu0 0.0
        %1393 = vmatmul.mubr.f32.gmra.mxu0 %v1171
        %v1394 = vpop.f32.mrf.mxu0
        %v1395 = vadd.f32 %v1076, %v1394
        %v1396 = vpop.f32.mrf.mxu0
        %1397 = vdwg.mxu0
        %v1398 = vsub.f32 0.0, %v1240
        %v1399 = vsub.f32 0.0, %v1245
        %v1400 = vsub.f32 0.0, %v1250
        %v1401 = vsub.f32 0.0, %v1255
        %v1402 = vsub.f32 0.0, %v1260
        %v1403 = vsub.f32 0.0, %v1265
        %v1404 = vsub.f32 0.0, %v1270
        %v1405 = vsub.f32 0.0, %v1275
        %v1406 = vsub.f32 0.0, %v1280
        %v1407 = vsub.f32 0.0, %v1285
        %v1408 = vsub.f32 0.0, %v1290
        %v1409 = vsub.f32 0.0, %v1295
        %v1410 = vsub.f32 0.0, %v1300
        %v1411 = vsub.f32 0.0, %v1305
        %v1412 = vsub.f32 0.0, %v1310
        %v1413 = vsub.f32 0.0, %v1315
        %v1414 = vsub.f32 0.0, %v1320
        %v1415 = vsub.f32 0.0, %v1325
        %v1416 = vsub.f32 0.0, %v1330
        %v1417 = vsub.f32 0.0, %v1335
        %v1418 = vsub.f32 0.0, %v1340
        %v1419 = vsub.f32 0.0, %v1345
        %v1420 = vsub.f32 0.0, %v1350
        %v1421 = vsub.f32 0.0, %v1355
        %v1422 = vsub.f32 0.0, %v1360
        %v1423 = vsub.f32 0.0, %v1365
        %v1424 = vsub.f32 0.0, %v1370
        %v1425 = vsub.f32 0.0, %v1375
        %v1426 = vsub.f32 0.0, %v1380
        %v1427 = vsub.f32 0.0, %v1385
        %v1428 = vsub.f32 0.0, %v1390
        %v1429 = vsub.f32 0.0, %v1395
        %v1430 = vmul.f32 %v1398, 1.442695
        %v1431 = vpow.pop %v1430
        %v1432 = vmul.f32 %v1399, 1.442695
        %v1433 = vpow.pop %v1432
        %v1434 = vmul.f32 %v1400, 1.442695
        %v1435 = vpow.pop %v1434
        %v1436 = vmul.f32 %v1401, 1.442695
        %v1437 = vpow.pop %v1436
        %v1438 = vmul.f32 %v1402, 1.442695
        %v1439 = vpow.pop %v1438
        %v1440 = vmul.f32 %v1403, 1.442695
        %v1441 = vpow.pop %v1440
        %v1442 = vmul.f32 %v1404, 1.442695
        %v1443 = vpow.pop %v1442
        %v1444 = vmul.f32 %v1405, 1.442695
        %v1445 = vpow.pop %v1444
        %v1446 = vmul.f32 %v1406, 1.442695
        %v1447 = vpow.pop %v1446
        %v1448 = vmul.f32 %v1407, 1.442695
        %v1449 = vpow.pop %v1448
        %v1450 = vmul.f32 %v1408, 1.442695
        %v1451 = vpow.pop %v1450
        %v1452 = vmul.f32 %v1409, 1.442695
        %v1453 = vpow.pop %v1452
        %v1454 = vmul.f32 %v1410, 1.442695
        %v1455 = vpow.pop %v1454
        %v1456 = vmul.f32 %v1411, 1.442695
        %v1457 = vpow.pop %v1456
        %v1458 = vmul.f32 %v1412, 1.442695
        %v1459 = vpow.pop %v1458
        %v1460 = vmul.f32 %v1413, 1.442695
        %v1461 = vpow.pop %v1460
        %v1462 = vmul.f32 %v1414, 1.442695
        %v1463 = vpow.pop %v1462
        %v1464 = vmul.f32 %v1415, 1.442695
        %v1465 = vpow.pop %v1464
        %v1466 = vmul.f32 %v1416, 1.442695
        %v1467 = vpow.pop %v1466
        %v1468 = vmul.f32 %v1417, 1.442695
        %v1469 = vpow.pop %v1468
        %v1470 = vmul.f32 %v1418, 1.442695
        %v1471 = vpow.pop %v1470
        %v1472 = vmul.f32 %v1419, 1.442695
        %v1473 = vpow.pop %v1472
        %v1474 = vmul.f32 %v1420, 1.442695
        %v1475 = vpow.pop %v1474
        %v1476 = vmul.f32 %v1421, 1.442695
        %v1477 = vpow.pop %v1476
        %v1478 = vmul.f32 %v1422, 1.442695
        %v1479 = vpow.pop %v1478
        %v1480 = vmul.f32 %v1423, 1.442695
        %v1481 = vpow.pop %v1480
        %v1482 = vmul.f32 %v1424, 1.442695
        %v1483 = vpow.pop %v1482
        %v1484 = vmul.f32 %v1425, 1.442695
        %v1485 = vpow.pop %v1484
        %v1486 = vmul.f32 %v1426, 1.442695
        %v1487 = vpow.pop %v1486
        %v1488 = vmul.f32 %v1427, 1.442695
        %v1489 = vpow.pop %v1488
        %v1490 = vmul.f32 %v1428, 1.442695
        %v1491 = vpow.pop %v1490
        %v1492 = vmul.f32 %v1429, 1.442695
        %v1493 = vpow.pop %v1492
        %v1494 = vadd.f32 %v1431, 1.0
        %v1495 = vadd.f32 %v1433, 1.0
        %v1496 = vadd.f32 %v1435, 1.0
        %v1497 = vadd.f32 %v1437, 1.0
        %v1498 = vadd.f32 %v1439, 1.0
        %v1499 = vadd.f32 %v1441, 1.0
        %v1500 = vadd.f32 %v1443, 1.0
        %v1501 = vadd.f32 %v1445, 1.0
        %v1502 = vadd.f32 %v1447, 1.0
        %v1503 = vadd.f32 %v1449, 1.0
        %v1504 = vadd.f32 %v1451, 1.0
        %v1505 = vadd.f32 %v1453, 1.0
        %v1506 = vadd.f32 %v1455, 1.0
        %v1507 = vadd.f32 %v1457, 1.0
        %v1508 = vadd.f32 %v1459, 1.0
        %v1509 = vadd.f32 %v1461, 1.0
        %v1510 = vadd.f32 %v1463, 1.0
        %v1511 = vadd.f32 %v1465, 1.0
        %v1512 = vadd.f32 %v1467, 1.0
        %v1513 = vadd.f32 %v1469, 1.0
        %v1514 = vadd.f32 %v1471, 1.0
        %v1515 = vadd.f32 %v1473, 1.0
        %v1516 = vadd.f32 %v1475, 1.0
        %v1517 = vadd.f32 %v1477, 1.0
        %v1518 = vadd.f32 %v1479, 1.0
        %v1519 = vadd.f32 %v1481, 1.0
        %v1520 = vadd.f32 %v1483, 1.0
        %v1521 = vadd.f32 %v1485, 1.0
        %v1522 = vadd.f32 %v1487, 1.0
        %v1523 = vadd.f32 %v1489, 1.0
        %v1524 = vadd.f32 %v1491, 1.0
        %v1525 = vadd.f32 %v1493, 1.0
        %v1526 = vrcp.pop %v1494
        %v1527 = vmul.f32 1.0, %v1526
        %v1528 = vrcp.pop %v1495
        %v1529 = vmul.f32 1.0, %v1528
        %v1530 = vrcp.pop %v1496
        %v1531 = vmul.f32 1.0, %v1530
        %v1532 = vrcp.pop %v1497
        %v1533 = vmul.f32 1.0, %v1532
        %v1534 = vrcp.pop %v1498
        %v1535 = vmul.f32 1.0, %v1534
        %v1536 = vrcp.pop %v1499
        %v1537 = vmul.f32 1.0, %v1536
        %v1538 = vrcp.pop %v1500
        %v1539 = vmul.f32 1.0, %v1538
        %v1540 = vrcp.pop %v1501
        %v1541 = vmul.f32 1.0, %v1540
        %v1542 = vrcp.pop %v1502
        %v1543 = vmul.f32 1.0, %v1542
        %v1544 = vrcp.pop %v1503
        %v1545 = vmul.f32 1.0, %v1544
        %v1546 = vrcp.pop %v1504
        %v1547 = vmul.f32 1.0, %v1546
        %v1548 = vrcp.pop %v1505
        %v1549 = vmul.f32 1.0, %v1548
        %v1550 = vrcp.pop %v1506
        %v1551 = vmul.f32 1.0, %v1550
        %v1552 = vrcp.pop %v1507
        %v1553 = vmul.f32 1.0, %v1552
        %v1554 = vrcp.pop %v1508
        %v1555 = vmul.f32 1.0, %v1554
        %v1556 = vrcp.pop %v1509
        %v1557 = vmul.f32 1.0, %v1556
        %v1558 = vrcp.pop %v1510
        %v1559 = vmul.f32 1.0, %v1558
        %v1560 = vrcp.pop %v1511
        %v1561 = vmul.f32 1.0, %v1560
        %v1562 = vrcp.pop %v1512
        %v1563 = vmul.f32 1.0, %v1562
        %v1564 = vrcp.pop %v1513
        %v1565 = vmul.f32 1.0, %v1564
        %v1566 = vrcp.pop %v1514
        %v1567 = vmul.f32 1.0, %v1566
        %v1568 = vrcp.pop %v1515
        %v1569 = vmul.f32 1.0, %v1568
        %v1570 = vrcp.pop %v1516
        %v1571 = vmul.f32 1.0, %v1570
        %v1572 = vrcp.pop %v1517
        %v1573 = vmul.f32 1.0, %v1572
        %v1574 = vrcp.pop %v1518
        %v1575 = vmul.f32 1.0, %v1574
        %v1576 = vrcp.pop %v1519
        %v1577 = vmul.f32 1.0, %v1576
        %v1578 = vrcp.pop %v1520
        %v1579 = vmul.f32 1.0, %v1578
        %v1580 = vrcp.pop %v1521
        %v1581 = vmul.f32 1.0, %v1580
        %v1582 = vrcp.pop %v1522
        %v1583 = vmul.f32 1.0, %v1582
        %v1584 = vrcp.pop %v1523
        %v1585 = vmul.f32 1.0, %v1584
        %v1586 = vrcp.pop %v1524
        %v1587 = vmul.f32 1.0, %v1586
        %v1588 = vrcp.pop %v1525
        %v1589 = vmul.f32 1.0, %v1588
        %vm1590 = vcmask 7168
        %1591 = vst.msk [vmem:[%s281] sm:$0xff] %vm1590, %v1527
        %1592 = vst.msk [vmem:[%s281 + $0x8] sm:$0xff] %vm1590, %v1529
        %1593 = vst.msk [vmem:[%s281 + $0x10] sm:$0xff] %vm1590, %v1531
        %1594 = vst.msk [vmem:[%s281 + $0x18] sm:$0xff] %vm1590, %v1533
        %1595 = vst.msk [vmem:[%s281 + $0x20] sm:$0xff] %vm1590, %v1535
        %1596 = vst.msk [vmem:[%s281 + $0x28] sm:$0xff] %vm1590, %v1537
        %1597 = vst.msk [vmem:[%s281 + $0x30] sm:$0xff] %vm1590, %v1539
        %1598 = vst.msk [vmem:[%s281 + $0x38] sm:$0xff] %vm1590, %v1541
        %1599 = vst.msk [vmem:[%s281 + $0x40] sm:$0xff] %vm1590, %v1543
        %1600 = vst.msk [vmem:[%s281 + $0x48] sm:$0xff] %vm1590, %v1545
        %1601 = vst.msk [vmem:[%s281 + $0x50] sm:$0xff] %vm1590, %v1547
        %1602 = vst.msk [vmem:[%s281 + $0x58] sm:$0xff] %vm1590, %v1549
        %1603 = vst.msk [vmem:[%s281 + $0x60] sm:$0xff] %vm1590, %v1551
        %1604 = vst.msk [vmem:[%s281 + $0x68] sm:$0xff] %vm1590, %v1553
        %1605 = vst.msk [vmem:[%s281 + $0x70] sm:$0xff] %vm1590, %v1555
        %1606 = vst.msk [vmem:[%s281 + $0x78] sm:$0xff] %vm1590, %v1557
        %1607 = vst.msk [vmem:[%s281 + $0x80] sm:$0xff] %vm1590, %v1559
        %1608 = vst.msk [vmem:[%s281 + $0x88] sm:$0xff] %vm1590, %v1561
        %1609 = vst.msk [vmem:[%s281 + $0x90] sm:$0xff] %vm1590, %v1563
        %1610 = vst.msk [vmem:[%s281 + $0x98] sm:$0xff] %vm1590, %v1565
        %1611 = vst.msk [vmem:[%s281 + $0xa0] sm:$0xff] %vm1590, %v1567
        %1612 = vst.msk [vmem:[%s281 + $0xa8] sm:$0xff] %vm1590, %v1569
        %1613 = vst.msk [vmem:[%s281 + $0xb0] sm:$0xff] %vm1590, %v1571
        %1614 = vst.msk [vmem:[%s281 + $0xb8] sm:$0xff] %vm1590, %v1573
        %1615 = vst.msk [vmem:[%s281 + $0xc0] sm:$0xff] %vm1590, %v1575
        %1616 = vst.msk [vmem:[%s281 + $0xc8] sm:$0xff] %vm1590, %v1577
        %1617 = vst.msk [vmem:[%s281 + $0xd0] sm:$0xff] %vm1590, %v1579
        %1618 = vst.msk [vmem:[%s281 + $0xd8] sm:$0xff] %vm1590, %v1581
        %1619 = vst.msk [vmem:[%s281 + $0xe0] sm:$0xff] %vm1590, %v1583
        %1620 = vst.msk [vmem:[%s281 + $0xe8] sm:$0xff] %vm1590, %v1585
        %1621 = vst.msk [vmem:[%s281 + $0xf0] sm:$0xff] %vm1590, %v1587
        %1622 = vst.msk [vmem:[%s281 + $0xf8] sm:$0xff] %vm1590, %v1589
        %s1623 = sand.u32 %s179, 1
        %s1624 = sand.u32 %s179, 1
        %s1625 = smul.addr %s1624, 256
        %s1626 = scalar_lea.vmem [#allocation3], %s1625
        // Predicated region
        $region49: #{tpu_custom_call.1} parent=47 // pred_check
          %p1627 = pneg %p189
        $region50: #{tpu_custom_call.1} parent=47 // pred_check_branch
          %1629 = sbr.rel (%p1627) target = $region52
        $region51: #{tpu_custom_call.1} parent=47 // pred_region
          %s1630 = smul.u32 32, %s19
          %s1631 = ssub.s32 63, %s1630
          %p1632 = scmp.lt.s32.totalorder %s1631, 32
          %s1633 = scalar_select %p1632, %s1631, 32
          %s1634 = smul.u32 128, %s1633
          %p1635 = scmp.ne.s32.totalorder 0, %s1634
          %s1636 = smul.addr %s1630, 8
          %s1637 = scalar_lea.vmem %s7, %s1636
          // Predicated region
          $region53: #{tpu_custom_call.1} parent=51 // pred_check
            %p1638 = pneg %p1635
          $region54: #{tpu_custom_call.1} parent=51 // pred_check_branch
            %1640 = sbr.rel (%p1638) target = $region56
          $region55: #{tpu_custom_call.1} parent=51 // pred_region
            // Predicated region
            $region57: #{tpu_custom_call.1} parent=55 // pred_check
              _
            $region58: #{tpu_custom_call.1} parent=55 // pred_check_branch
              %1642 = sbr.rel (0) target = $region60
            $region59: #{tpu_custom_call.1} parent=55 // pred_region
              // Predicated region
              $region79: #{tpu_custom_call.1} parent=59 // pred_check
                _
              $region80: #{tpu_custom_call.1} parent=59 // pred_check_branch
                %1754 = sbr.rel (0) target = $region82
              $region81: #{tpu_custom_call.1} parent=59 // pred_region
                %s1755 = sshrl.u32 %s1633, 5
                // While loop
                $region83: #{tpu_custom_call.1} parent=81 // loop_pre_header
                  _
                $region84: #{tpu_custom_call.1} parent=81 // loop_header
                  %s1757 = sphi 0, %s1759
                  %p1758 = scmp.ge.s32.totalorder %s1757, %s1755
                  %s1762 = sphi 0, %s1831
                  %s1763 = sphi %s1626, %s1834
                  %s1764 = sphi %s1637, %s1835
                $region85: #{tpu_custom_call.1} parent=81 // loop_header_branch
                  %1761 = sbr.rel (%p1758) target = $region89
                $region86: #{tpu_custom_call.1} parent=81 // loop_body
                  %v1765 = vld [vmem:[%s1763] sm:$0xff]
                  %1766 = vst [vmem:[%s1764] sm:$0xff] %v1765
                  %v1767 = vld [vmem:[%s1763 + $0x8] sm:$0xff]
                  %1768 = vst [vmem:[%s1764 + $0x8] sm:$0xff] %v1767
                  %v1769 = vld [vmem:[%s1763 + $0x10] sm:$0xff]
                  %1770 = vst [vmem:[%s1764 + $0x10] sm:$0xff] %v1769
                  %v1771 = vld [vmem:[%s1763 + $0x18] sm:$0xff]
                  %1772 = vst [vmem:[%s1764 + $0x18] sm:$0xff] %v1771
                  %v1773 = vld [vmem:[%s1763 + $0x20] sm:$0xff]
                  %1774 = vst [vmem:[%s1764 + $0x20] sm:$0xff] %v1773
                  %v1775 = vld [vmem:[%s1763 + $0x28] sm:$0xff]
                  %1776 = vst [vmem:[%s1764 + $0x28] sm:$0xff] %v1775
                  %v1777 = vld [vmem:[%s1763 + $0x30] sm:$0xff]
                  %1778 = vst [vmem:[%s1764 + $0x30] sm:$0xff] %v1777
                  %v1779 = vld [vmem:[%s1763 + $0x38] sm:$0xff]
                  %1780 = vst [vmem:[%s1764 + $0x38] sm:$0xff] %v1779
                  %v1781 = vld [vmem:[%s1763 + $0x40] sm:$0xff]
                  %1782 = vst [vmem:[%s1764 + $0x40] sm:$0xff] %v1781
                  %v1783 = vld [vmem:[%s1763 + $0x48] sm:$0xff]
                  %1784 = vst [vmem:[%s1764 + $0x48] sm:$0xff] %v1783
                  %v1785 = vld [vmem:[%s1763 + $0x50] sm:$0xff]
                  %1786 = vst [vmem:[%s1764 + $0x50] sm:$0xff] %v1785
                  %v1787 = vld [vmem:[%s1763 + $0x58] sm:$0xff]
                  %1788 = vst [vmem:[%s1764 + $0x58] sm:$0xff] %v1787
                  %v1789 = vld [vmem:[%s1763 + $0x60] sm:$0xff]
                  %1790 = vst [vmem:[%s1764 + $0x60] sm:$0xff] %v1789
                  %v1791 = vld [vmem:[%s1763 + $0x68] sm:$0xff]
                  %1792 = vst [vmem:[%s1764 + $0x68] sm:$0xff] %v1791
                  %v1793 = vld [vmem:[%s1763 + $0x70] sm:$0xff]
                  %1794 = vst [vmem:[%s1764 + $0x70] sm:$0xff] %v1793
                  %v1795 = vld [vmem:[%s1763 + $0x78] sm:$0xff]
                  %1796 = vst [vmem:[%s1764 + $0x78] sm:$0xff] %v1795
                  %v1797 = vld [vmem:[%s1763 + $0x80] sm:$0xff]
                  %1798 = vst [vmem:[%s1764 + $0x80] sm:$0xff] %v1797
                  %v1799 = vld [vmem:[%s1763 + $0x88] sm:$0xff]
                  %1800 = vst [vmem:[%s1764 + $0x88] sm:$0xff] %v1799
                  %v1801 = vld [vmem:[%s1763 + $0x90] sm:$0xff]
                  %1802 = vst [vmem:[%s1764 + $0x90] sm:$0xff] %v1801
                  %v1803 = vld [vmem:[%s1763 + $0x98] sm:$0xff]
                  %1804 = vst [vmem:[%s1764 + $0x98] sm:$0xff] %v1803
                  %v1805 = vld [vmem:[%s1763 + $0xa0] sm:$0xff]
                  %1806 = vst [vmem:[%s1764 + $0xa0] sm:$0xff] %v1805
                  %v1807 = vld [vmem:[%s1763 + $0xa8] sm:$0xff]
                  %1808 = vst [vmem:[%s1764 + $0xa8] sm:$0xff] %v1807
                  %v1809 = vld [vmem:[%s1763 + $0xb0] sm:$0xff]
                  %1810 = vst [vmem:[%s1764 + $0xb0] sm:$0xff] %v1809
                  %v1811 = vld [vmem:[%s1763 + $0xb8] sm:$0xff]
                  %1812 = vst [vmem:[%s1764 + $0xb8] sm:$0xff] %v1811
                  %v1813 = vld [vmem:[%s1763 + $0xc0] sm:$0xff]
                  %1814 = vst [vmem:[%s1764 + $0xc0] sm:$0xff] %v1813
                  %v1815 = vld [vmem:[%s1763 + $0xc8] sm:$0xff]
                  %1816 = vst [vmem:[%s1764 + $0xc8] sm:$0xff] %v1815
                  %v1817 = vld [vmem:[%s1763 + $0xd0] sm:$0xff]
                  %1818 = vst [vmem:[%s1764 + $0xd0] sm:$0xff] %v1817
                  %v1819 = vld [vmem:[%s1763 + $0xd8] sm:$0xff]
                  %1820 = vst [vmem:[%s1764 + $0xd8] sm:$0xff] %v1819
                  %v1821 = vld [vmem:[%s1763 + $0xe0] sm:$0xff]
                  %1822 = vst [vmem:[%s1764 + $0xe0] sm:$0xff] %v1821
                  %v1823 = vld [vmem:[%s1763 + $0xe8] sm:$0xff]
                  %1824 = vst [vmem:[%s1764 + $0xe8] sm:$0xff] %v1823
                  %v1825 = vld [vmem:[%s1763 + $0xf0] sm:$0xff]
                  %1826 = vst [vmem:[%s1764 + $0xf0] sm:$0xff] %v1825
                  %v1827 = vld [vmem:[%s1763 + $0xf8] sm:$0xff]
                  %1828 = vst [vmem:[%s1764 + $0xf8] sm:$0xff] %v1827
                  %s1829 = sadd.s32 1, %s1762
                  %p1830 = scmp.ge.s32.totalorder %s1829, %s1755
                  %s1831 = scalar_select %p1830, 0, %s1829
                  %s1832 = smul.u32 %s1831, 256
                  %s1833 = smul.u32 %s1831, 256
                  %s1834 = scalar_lea.vmem %s1626, %s1832 [#allocation3]
                  %s1835 = scalar_lea.vmem %s1637, %s1833
                $region87: #{tpu_custom_call.1} parent=81 // loop_footer
                  %s1759 = sadd.s32 %s1757, 1
                $region88: #{tpu_custom_call.1} parent=81 // loop_footer_branch
                  %1756 = sbr.rel target = $region84
                $region89: #{tpu_custom_call.1} parent=81 // loop_exit
                  _
                %s1836 = sshrl.u32 %s1633, 5
                %s1837 = sand.u32 %s1633, 31
                %s1838 = smul.u32 %s1836, 32
                %s1839 = smul.u32 8, %s1838
                %s1840 = scalar_lea.vmem %s1626, %s1839 [#allocation3]
                %s1841 = smul.u32 8, %s1838
                %s1842 = scalar_lea.vmem %s1637, %s1841
                // While loop
                $region90: #{tpu_custom_call.1} parent=81 // loop_pre_header
                  _
                $region91: #{tpu_custom_call.1} parent=81 // loop_header
                  %s1844 = sphi 0, %s1846
                  %p1845 = scmp.ge.s32.totalorder %s1844, %s1837
                  %s1849 = sphi 0, %s1856
                  %s1850 = sphi %s1840, %s1859
                  %s1851 = sphi %s1842, %s1860
                $region92: #{tpu_custom_call.1} parent=81 // loop_header_branch
                  %1848 = sbr.rel (%p1845) target = $region96
                $region93: #{tpu_custom_call.1} parent=81 // loop_body
                  %v1852 = vld [vmem:[%s1850] sm:$0xff]
                  %1853 = vst [vmem:[%s1851] sm:$0xff] %v1852
                  %s1854 = sadd.s32 1, %s1849
                  %p1855 = scmp.ge.s32.totalorder %s1854, %s1837
                  %s1856 = scalar_select %p1855, 0, %s1854
                  %s1857 = smul.u32 %s1856, 8
                  %s1858 = smul.u32 %s1856, 8
                  %s1859 = scalar_lea.vmem %s1840, %s1857 [#allocation3]
                  %s1860 = scalar_lea.vmem %s1842, %s1858
                $region94: #{tpu_custom_call.1} parent=81 // loop_footer
                  %s1846 = sadd.s32 %s1844, 1
                $region95: #{tpu_custom_call.1} parent=81 // loop_footer_branch
                  %1843 = sbr.rel target = $region91
                $region96: #{tpu_custom_call.1} parent=81 // loop_exit
                  _
              $region82: #{tpu_custom_call.1} parent=59 // pred_fallthru
                _
              // Predicated region
              $region97: #{tpu_custom_call.1} parent=59 // pred_check
                _
              $region98: #{tpu_custom_call.1} parent=59 // pred_check_branch
                %1862 = sbr.rel target = $region100
              $region99: #{tpu_custom_call.1} parent=59 // pred_region
                _
              $region100: #{tpu_custom_call.1} parent=59 // pred_fallthru
                _
            $region60: #{tpu_custom_call.1} parent=55 // pred_fallthru
              _
            // Predicated region
            $region61: #{tpu_custom_call.1} parent=55 // pred_check
              _
            $region62: #{tpu_custom_call.1} parent=55 // pred_check_branch
              %1644 = sbr.rel target = $region64
            $region63: #{tpu_custom_call.1} parent=55 // pred_region
              %s1646 = ssub.s32 256, 1
              %s1647 = sshrl.u32 %s1633, 5
              // While loop
              $region65: #{tpu_custom_call.1} parent=63 // loop_pre_header
                _
              $region66: #{tpu_custom_call.1} parent=63 // loop_header
                %s1649 = sphi 0, %s1651
                %p1650 = scmp.ge.s32.totalorder %s1649, %s1647
                %s1654 = sphi 0, %s1723
                %s1655 = sphi %s1626, %s1726
                %s1656 = sphi %s1637, %s1727
              $region67: #{tpu_custom_call.1} parent=63 // loop_header_branch
                %1653 = sbr.rel (%p1650) target = $region71
              $region68: #{tpu_custom_call.1} parent=63 // loop_body
                %v1657 = vld [vmem:[%s1655] sm:%s1646]
                %1658 = vst [vmem:[%s1656] sm:%s1646] %v1657
                %v1659 = vld [vmem:[%s1655 + $0x8] sm:%s1646]
                %1660 = vst [vmem:[%s1656 + $0x8] sm:%s1646] %v1659
                %v1661 = vld [vmem:[%s1655 + $0x10] sm:%s1646]
                %1662 = vst [vmem:[%s1656 + $0x10] sm:%s1646] %v1661
                %v1663 = vld [vmem:[%s1655 + $0x18] sm:%s1646]
                %1664 = vst [vmem:[%s1656 + $0x18] sm:%s1646] %v1663
                %v1665 = vld [vmem:[%s1655 + $0x20] sm:%s1646]
                %1666 = vst [vmem:[%s1656 + $0x20] sm:%s1646] %v1665
                %v1667 = vld [vmem:[%s1655 + $0x28] sm:%s1646]
                %1668 = vst [vmem:[%s1656 + $0x28] sm:%s1646] %v1667
                %v1669 = vld [vmem:[%s1655 + $0x30] sm:%s1646]
                %1670 = vst [vmem:[%s1656 + $0x30] sm:%s1646] %v1669
                %v1671 = vld [vmem:[%s1655 + $0x38] sm:%s1646]
                %1672 = vst [vmem:[%s1656 + $0x38] sm:%s1646] %v1671
                %v1673 = vld [vmem:[%s1655 + $0x40] sm:%s1646]
                %1674 = vst [vmem:[%s1656 + $0x40] sm:%s1646] %v1673
                %v1675 = vld [vmem:[%s1655 + $0x48] sm:%s1646]
                %1676 = vst [vmem:[%s1656 + $0x48] sm:%s1646] %v1675
                %v1677 = vld [vmem:[%s1655 + $0x50] sm:%s1646]
                %1678 = vst [vmem:[%s1656 + $0x50] sm:%s1646] %v1677
                %v1679 = vld [vmem:[%s1655 + $0x58] sm:%s1646]
                %1680 = vst [vmem:[%s1656 + $0x58] sm:%s1646] %v1679
                %v1681 = vld [vmem:[%s1655 + $0x60] sm:%s1646]
                %1682 = vst [vmem:[%s1656 + $0x60] sm:%s1646] %v1681
                %v1683 = vld [vmem:[%s1655 + $0x68] sm:%s1646]
                %1684 = vst [vmem:[%s1656 + $0x68] sm:%s1646] %v1683
                %v1685 = vld [vmem:[%s1655 + $0x70] sm:%s1646]
                %1686 = vst [vmem:[%s1656 + $0x70] sm:%s1646] %v1685
                %v1687 = vld [vmem:[%s1655 + $0x78] sm:%s1646]
                %1688 = vst [vmem:[%s1656 + $0x78] sm:%s1646] %v1687
                %v1689 = vld [vmem:[%s1655 + $0x80] sm:%s1646]
                %1690 = vst [vmem:[%s1656 + $0x80] sm:%s1646] %v1689
                %v1691 = vld [vmem:[%s1655 + $0x88] sm:%s1646]
                %1692 = vst [vmem:[%s1656 + $0x88] sm:%s1646] %v1691
                %v1693 = vld [vmem:[%s1655 + $0x90] sm:%s1646]
                %1694 = vst [vmem:[%s1656 + $0x90] sm:%s1646] %v1693
                %v1695 = vld [vmem:[%s1655 + $0x98] sm:%s1646]
                %1696 = vst [vmem:[%s1656 + $0x98] sm:%s1646] %v1695
                %v1697 = vld [vmem:[%s1655 + $0xa0] sm:%s1646]
                %1698 = vst [vmem:[%s1656 + $0xa0] sm:%s1646] %v1697
                %v1699 = vld [vmem:[%s1655 + $0xa8] sm:%s1646]
                %1700 = vst [vmem:[%s1656 + $0xa8] sm:%s1646] %v1699
                %v1701 = vld [vmem:[%s1655 + $0xb0] sm:%s1646]
                %1702 = vst [vmem:[%s1656 + $0xb0] sm:%s1646] %v1701
                %v1703 = vld [vmem:[%s1655 + $0xb8] sm:%s1646]
                %1704 = vst [vmem:[%s1656 + $0xb8] sm:%s1646] %v1703
                %v1705 = vld [vmem:[%s1655 + $0xc0] sm:%s1646]
                %1706 = vst [vmem:[%s1656 + $0xc0] sm:%s1646] %v1705
                %v1707 = vld [vmem:[%s1655 + $0xc8] sm:%s1646]
                %1708 = vst [vmem:[%s1656 + $0xc8] sm:%s1646] %v1707
                %v1709 = vld [vmem:[%s1655 + $0xd0] sm:%s1646]
                %1710 = vst [vmem:[%s1656 + $0xd0] sm:%s1646] %v1709
                %v1711 = vld [vmem:[%s1655 + $0xd8] sm:%s1646]
                %1712 = vst [vmem:[%s1656 + $0xd8] sm:%s1646] %v1711
                %v1713 = vld [vmem:[%s1655 + $0xe0] sm:%s1646]
                %1714 = vst [vmem:[%s1656 + $0xe0] sm:%s1646] %v1713
                %v1715 = vld [vmem:[%s1655 + $0xe8] sm:%s1646]
                %1716 = vst [vmem:[%s1656 + $0xe8] sm:%s1646] %v1715
                %v1717 = vld [vmem:[%s1655 + $0xf0] sm:%s1646]
                %1718 = vst [vmem:[%s1656 + $0xf0] sm:%s1646] %v1717
                %v1719 = vld [vmem:[%s1655 + $0xf8] sm:%s1646]
                %1720 = vst [vmem:[%s1656 + $0xf8] sm:%s1646] %v1719
                %s1721 = sadd.s32 1, %s1654
                %p1722 = scmp.ge.s32.totalorder %s1721, %s1647
                %s1723 = scalar_select %p1722, 0, %s1721
                %s1724 = smul.u32 %s1723, 256
                %s1725 = smul.u32 %s1723, 256
                %s1726 = scalar_lea.vmem %s1626, %s1724 [#allocation3]
                %s1727 = scalar_lea.vmem %s1637, %s1725
              $region69: #{tpu_custom_call.1} parent=63 // loop_footer
                %s1651 = sadd.s32 %s1649, 1
              $region70: #{tpu_custom_call.1} parent=63 // loop_footer_branch
                %1648 = sbr.rel target = $region66
              $region71: #{tpu_custom_call.1} parent=63 // loop_exit
                _
              %s1728 = sshrl.u32 %s1633, 5
              %s1729 = sand.u32 %s1633, 31
              %s1730 = smul.u32 %s1728, 32
              %s1731 = smul.u32 8, %s1730
              %s1732 = scalar_lea.vmem %s1626, %s1731 [#allocation3]
              %s1733 = smul.u32 8, %s1730
              %s1734 = scalar_lea.vmem %s1637, %s1733
              // While loop
              $region72: #{tpu_custom_call.1} parent=63 // loop_pre_header
                _
              $region73: #{tpu_custom_call.1} parent=63 // loop_header
                %s1736 = sphi 0, %s1738
                %p1737 = scmp.ge.s32.totalorder %s1736, %s1729
                %s1741 = sphi 0, %s1748
                %s1742 = sphi %s1732, %s1751
                %s1743 = sphi %s1734, %s1752
              $region74: #{tpu_custom_call.1} parent=63 // loop_header_branch
                %1740 = sbr.rel (%p1737) target = $region78
              $region75: #{tpu_custom_call.1} parent=63 // loop_body
                %v1744 = vld [vmem:[%s1742] sm:%s1646]
                %1745 = vst [vmem:[%s1743] sm:%s1646] %v1744
                %s1746 = sadd.s32 1, %s1741
                %p1747 = scmp.ge.s32.totalorder %s1746, %s1729
                %s1748 = scalar_select %p1747, 0, %s1746
                %s1749 = smul.u32 %s1748, 8
                %s1750 = smul.u32 %s1748, 8
                %s1751 = scalar_lea.vmem %s1732, %s1749 [#allocation3]
                %s1752 = scalar_lea.vmem %s1734, %s1750
              $region76: #{tpu_custom_call.1} parent=63 // loop_footer
                %s1738 = sadd.s32 %s1736, 1
              $region77: #{tpu_custom_call.1} parent=63 // loop_footer_branch
                %1735 = sbr.rel target = $region73
              $region78: #{tpu_custom_call.1} parent=63 // loop_exit
                _
            $region64: #{tpu_custom_call.1} parent=55 // pred_fallthru
              _
          $region56: #{tpu_custom_call.1} parent=51 // pred_fallthru
            _
          %1863 = vnop
        $region52: #{tpu_custom_call.1} parent=47 // pred_fallthru
          _
      $region48: #{tpu_custom_call.1} parent=5 // pred_fallthru
        _
      %p1864 = scmp.le.s32.totalorder 2, %s14
      // Predicated region
      $region101: #{tpu_custom_call.1} parent=5 // pred_check
        %p1865 = pneg %p1864
      $region102: #{tpu_custom_call.1} parent=5 // pred_check_branch
        %1867 = sbr.rel (%p1865) target = $region104
      $region103: #{tpu_custom_call.1} parent=5 // pred_region
        %s1868 = ssub.s32 %s14, 2
        // Predicated region
        $region105: #{tpu_custom_call.1} parent=103 // pred_check
          %p1869 = pneg %p195
        $region106: #{tpu_custom_call.1} parent=103 // pred_check_branch
          %1871 = sbr.rel (%p1869) target = $region108
        $region107: #{tpu_custom_call.1} parent=103 // pred_region
          %s1872 = sand.u32 %s180, 1
          %s1873 = sand.u32 %s180, 1
          %s1874 = smul.addr %s1873, 256
          %s1875 = scalar_lea.vmem [#allocation3], %s1874
        $region108: #{tpu_custom_call.1} parent=103 // pred_fallthru
          _
      $region104: #{tpu_custom_call.1} parent=5 // pred_fallthru
        _
    $region6: #{tpu_custom_call.1} parent=1 // loop_footer
      %s18 = sadd.s32 1, %s14
    $region7: #{tpu_custom_call.1} parent=1 // loop_footer_branch
      %13 = sbr.rel target = $region3
    $region8: #{tpu_custom_call.1} parent=1 // loop_exit
      _

</llo_original>
